<compile_context>
chip_gen: v6e
topology: v6e:2x2x1
jax: 0.10.0
libtpu: 0.0.40
codegen_flags: <defaults>
</compile_context>

<pallas_src>
import functools

import jax
import jax.numpy as jnp
from jax import lax
from jax.experimental import pallas as pl
from jax.experimental.pallas import tpu as pltpu


def _attn_kernel(x_q_ref, x_kv_ref, wq_ref, bq_ref, wkv_ref, bkv_ref, wo_ref,
                 bo_ref, o_ref, q_scr, m_scr, l_scr, acc_scr, out_scr,
                 *, head_dim, scale):
    h = pl.program_id(2)
    ki = pl.program_id(3)
    n_heads = pl.num_programs(2)
    n_kv = pl.num_programs(3)

    # New (batch, q-tile) group: clear the fused output-projection accumulator.
    @pl.when(jnp.logical_and(h == 0, ki == 0))
    def _():
        out_scr[...] = jnp.zeros(out_scr.shape, out_scr.dtype)

    # New head: project this q tile once per head and reset online-softmax state.
    @pl.when(ki == 0)
    def _():
        x_q = x_q_ref[0]                                        # (tq, C), input dtype
        q = jnp.dot(x_q, wq_ref[0], preferred_element_type=jnp.float32)
        q = (q + bq_ref[0].astype(jnp.float32)) * scale         # (tq, D), f32
        q_scr[...] = q.astype(q_scr.dtype)
        m_scr[...] = jnp.full(m_scr.shape, -jnp.inf, m_scr.dtype)
        l_scr[...] = jnp.zeros(l_scr.shape, l_scr.dtype)
        acc_scr[...] = jnp.zeros(acc_scr.shape, acc_scr.dtype)

    # Fused K|V projection of the current kv tile for this head (one MXU op).
    x_kv = x_kv_ref[0]                                          # (tk, C), input dtype
    kv = jnp.dot(x_kv, wkv_ref[0], preferred_element_type=jnp.float32)
    kv = kv + bkv_ref[0].astype(jnp.float32)                    # (tk, 2D), f32
    k = kv[:, :head_dim].astype(x_kv.dtype)                     # (tk, D)
    v = kv[:, head_dim:].astype(x_kv.dtype)                     # (tk, D)

    # Online softmax update (statistics kept in f32).
    s = lax.dot_general(q_scr[...], k, (((1,), (1,)), ((), ())),
                        preferred_element_type=jnp.float32)     # (tq, tk)
    m_prev = m_scr[...]
    m_new = jnp.maximum(m_prev, jnp.max(s, axis=-1, keepdims=True))
    alpha = jnp.exp(m_prev - m_new)
    p = jnp.exp(s - m_new)
    l_scr[...] = alpha * l_scr[...] + jnp.sum(p, axis=-1, keepdims=True)
    acc_scr[...] = alpha * acc_scr[...] + jnp.dot(
        p.astype(v.dtype), v, preferred_element_type=jnp.float32)
    m_scr[...] = m_new

    # Last kv tile of this head: normalize and fold this head's contribution
    # through its (D, C) slice of the output projection into the shared slab.
    @pl.when(ki == n_kv - 1)
    def _():
        y_h = acc_scr[...] * pl.reciprocal(l_scr[...], approx=True)   # (tq, D), f32
        out_scr[...] += jnp.dot(y_h.astype(wo_ref.dtype), wo_ref[0],
                                preferred_element_type=jnp.float32)

    # Last head and last kv tile: add output bias and store the (tq, C) tile.
    @pl.when(jnp.logical_and(h == n_heads - 1, ki == n_kv - 1))
    def _():
        o_ref[0] = (out_scr[...] + bo_ref[...].astype(jnp.float32)).astype(o_ref.dtype)


def encoder_attention(hidden_states, params, num_heads, *, tq=None, tk=None):
    """Multi-head self-attention: (B, T, C) -> (B, T, C).

    params holds (in, out)-layout Linear weights wq/wk/wv/wo of shape (C, C)
    and biases bq/bk/bv/bo of shape (1, C).
    """
    B, T, C = hidden_states.shape
    assert C % num_heads == 0
    D = C // num_heads
    # 256-wide tiles keep the v6e/v7x 2x256x256 MXU full; 128 suffices on v5e.
    if tq is None:
        tq = min(T, 256)
    if tk is None:
        tk = min(T, 256)
    assert T % tq == 0 and T % tk == 0
    nq, nk = T // tq, T // tk
    dtype = hidden_states.dtype

    # Host-side (free) weight re-layout into per-head, MXU-ready blocks.
    def per_head_w(w):   # (C, C) -> (H, C, D)
        return w.reshape(C, num_heads, D).transpose(1, 0, 2)

    def per_head_b(b):   # (1, C) -> (H, 1, D)
        return b.reshape(1, num_heads, D).transpose(1, 0, 2)

    wq = per_head_w(params["wq"])
    wkv = jnp.concatenate([per_head_w(params["wk"]), per_head_w(params["wv"])], axis=-1)
    bq = per_head_b(params["bq"])
    bkv = jnp.concatenate([per_head_b(params["bk"]), per_head_b(params["bv"])], axis=-1)
    wo = params["wo"].reshape(num_heads, D, C)
    bo = params["bo"]

    kernel = functools.partial(_attn_kernel, head_dim=D, scale=1.0 / (D ** 0.5))

    def x_q_map(b, qi, h, ki):  return (b, qi, 0)
    def x_kv_map(b, qi, h, ki): return (b, ki, 0)
    def head_map(b, qi, h, ki): return (h, 0, 0)
    def const_map(b, qi, h, ki): return (0, 0)
    def out_map(b, qi, h, ki):  return (b, qi, 0)

    cost = pl.CostEstimate(
        flops=int(B * (8 * T * C * C + 4 * T * T * C)),
        transcendentals=int(B * num_heads * T * T),
        bytes_accessed=int(3 * B * T * C * dtype.itemsize + 4 * C * C * dtype.itemsize),
    )

    def build(single_buffer_weights):
        # Weight/bias blocks are invariant over the inner reduction axes;
        # single-buffering halves their VMEM residency (matters on v7x 64 MiB
        # and v5e's 16 MiB scoped default), freeing headroom for bigger tiles.
        wkw = (dict(pipeline_mode=pl.Buffered(buffer_count=1))
               if single_buffer_weights else {})
        in_specs = [
            pl.BlockSpec((1, tq, C), x_q_map),               # q-side activations
            pl.BlockSpec((1, tk, C), x_kv_map),              # kv-side activations
            pl.BlockSpec((1, C, D), head_map, **wkw),        # wq  (per head)
            pl.BlockSpec((1, 1, D), head_map, **wkw),        # bq
            pl.BlockSpec((1, C, 2 * D), head_map, **wkw),    # wk|wv fused
            pl.BlockSpec((1, 1, 2 * D), head_map, **wkw),    # bk|bv fused
            pl.BlockSpec((1, D, C), head_map, **wkw),        # wo  (per head)
            pl.BlockSpec((1, C), const_map, **wkw),          # bo
        ]
        # NOTE: for real ViT configs C is a multiple of 128, so this store is
        # lane-dense; for toy C < 128 a (B, T*C)-folded output would avoid
        # masked partial stores.
        out_spec = pl.BlockSpec((1, tq, C), out_map)
        scratch = [
            pltpu.VMEM((tq, D), dtype),          # scaled q for current head
            pltpu.VMEM((tq, 1), jnp.float32),    # running max  m
            pltpu.VMEM((tq, 1), jnp.float32),    # running sum  l
            pltpu.VMEM((tq, D), jnp.float32),    # running per-head attention out
            pltpu.VMEM((tq, C), jnp.float32),    # fused out-projection accumulator
        ]
        return pl.pallas_call(
            kernel,
            out_shape=jax.ShapeDtypeStruct((B, T, C), dtype),
            grid_spec=pltpu.PrefetchScalarGridSpec(
                num_scalar_prefetch=0,
                grid=(B, nq, num_heads, nk),
                in_specs=in_specs,
                out_specs=out_spec,
                scratch_shapes=scratch),
            compiler_params=pltpu.CompilerParams(
                dimension_semantics=("parallel", "parallel", "arbitrary", "arbitrary"),
                vmem_limit_bytes=64 * 1024 * 1024),
            cost_estimate=cost,
        )

    args = (hidden_states, hidden_states, wq, bq, wkv, bkv, wo, bo)
    try:
        return build(single_buffer_weights=True)(*args)
    except Exception:
        # pl.Buffered(1) not supported by this JAX build -> default buffering.
        return build(single_buffer_weights=False)(*args)


def _reference(hidden_states, params, num_heads):
    """Plain-JAX reference for the correctness check."""
    B, T, C = hidden_states.shape
    D = C // num_heads
    x = hidden_states.astype(jnp.float32)

    def proj(w, b):
        return jnp.einsum("btc,cd->btd", x, w.astype(jnp.float32)) + b.astype(jnp.float32)

    q = proj(params["wq"], params["bq"]).reshape(B, T, num_heads, D).transpose(0, 2, 1, 3)
    k = proj(params["wk"], params["bk"]).reshape(B, T, num_heads, D).transpose(0, 2, 1, 3)
    v = proj(params["wv"], params["bv"]).reshape(B, T, num_heads, D).transpose(0, 2, 1, 3)
    s = jnp.einsum("bhqd,bhkd->bhqk", q, k) / (D ** 0.5)
    p = jax.nn.softmax(s, axis=-1)
    y = jnp.einsum("bhqk,bhkd->bhqd", p, v).transpose(0, 2, 1, 3).reshape(B, T, C)
    out = (jnp.einsum("btc,cd->btd", y, params["wo"].astype(jnp.float32))
           + params["bo"].astype(jnp.float32))
    return out.astype(hidden_states.dtype)


if __name__ == "__main__":
    # Config: hidden_size=32, num_attention_heads=4, attention_dropout=0.0
    B, T, C = 2, 8, 32
    num_heads = 4

    key = jax.random.PRNGKey(0)
    keys = jax.random.split(key, 9)
    w_scale = 0.02
    params = {
        "wq": w_scale * jax.random.normal(keys[0], (C, C), jnp.float32),
        "bq": w_scale * jax.random.normal(keys[1], (1, C), jnp.float32),
        "wk": w_scale * jax.random.normal(keys[2], (C, C), jnp.float32),
        "bk": w_scale * jax.random.normal(keys[3], (1, C), jnp.float32),
        "wv": w_scale * jax.random.normal(keys[4], (C, C), jnp.float32),
        "bv": w_scale * jax.random.normal(keys[5], (1, C), jnp.float32),
        "wo": w_scale * jax.random.normal(keys[6], (C, C), jnp.float32),
        "bo": w_scale * jax.random.normal(keys[7], (1, C), jnp.float32),
    }
    hidden_states = jax.random.normal(keys[8], (B, T, C), jnp.float32)

    out = encoder_attention(hidden_states, params, num_heads)
    out = jax.block_until_ready(out)

    ref = _reference(hidden_states, params, num_heads)
    assert out.shape == (B, T, C)
    max_err = float(jnp.max(jnp.abs(out.astype(jnp.float32) - ref.astype(jnp.float32))))
    assert max_err < 1e-4, max_err
    print("KERNEL_OK")
</pallas_src>

<mosaic_0001>
module attributes {stable_mosaic.version = 11 : i64} {
  func.func @_attn_kernel(%arg0: i32, %arg1: i32, %arg2: i32, %arg3: i32, %arg4: memref<1x8x32xf32, #tpu.memory_space<vmem>>, %arg5: memref<1x8x32xf32, #tpu.memory_space<vmem>>, %arg6: memref<1x32x8xf32, #tpu.memory_space<vmem>>, %arg7: memref<1x1x8xf32, #tpu.memory_space<vmem>>, %arg8: memref<1x32x16xf32, #tpu.memory_space<vmem>>, %arg9: memref<1x1x16xf32, #tpu.memory_space<vmem>>, %arg10: memref<1x8x32xf32, #tpu.memory_space<vmem>>, %arg11: memref<1x32xf32, #tpu.memory_space<vmem>>, %arg12: memref<1x8x32xf32, #tpu.memory_space<vmem>>, %arg13: memref<8x8xf32, #tpu.memory_space<vmem>>, %arg14: memref<8x1xf32, #tpu.memory_space<vmem>>, %arg15: memref<8x1xf32, #tpu.memory_space<vmem>>, %arg16: memref<8x8xf32, #tpu.memory_space<vmem>>, %arg17: memref<8x32xf32, #tpu.memory_space<vmem>>) attributes {dimension_semantics = [#tpu.dimension_semantics<parallel>, #tpu.dimension_semantics<parallel>, #tpu.dimension_semantics<arbitrary>, #tpu.dimension_semantics<arbitrary>], iteration_bounds = array<i64: 2, 1, 4, 1>, scalar_prefetch = 0 : i64, scratch_operands = 5 : i64, tpu.core_type = #tpu.core_type<tc>, window_params = [{transform_indices = @transform_0, window_bounds = array<i64: 1, 8, 32>}, {transform_indices = @transform_1, window_bounds = array<i64: 1, 8, 32>}, {pipeline_mode = #tpu.pipeline_mode<synchronous>, transform_indices = @transform_2, window_bounds = array<i64: 1, 32, 8>}, {pipeline_mode = #tpu.pipeline_mode<synchronous>, transform_indices = @transform_3, window_bounds = array<i64: 1, 1, 8>}, {pipeline_mode = #tpu.pipeline_mode<synchronous>, transform_indices = @transform_4, window_bounds = array<i64: 1, 32, 16>}, {pipeline_mode = #tpu.pipeline_mode<synchronous>, transform_indices = @transform_5, window_bounds = array<i64: 1, 1, 16>}, {pipeline_mode = #tpu.pipeline_mode<synchronous>, transform_indices = @transform_6, window_bounds = array<i64: 1, 8, 32>}, {pipeline_mode = #tpu.pipeline_mode<synchronous>, transform_indices = @transform_7, window_bounds = array<i64: 1, 32>}, {transform_indices = @transform_8, window_bounds = array<i64: 1, 8, 32>}]} {
    %c0_i32 = arith.constant 0 : i32
    %0 = arith.cmpi eq, %arg2, %c0_i32 : i32
    %c0_i32_0 = arith.constant 0 : i32
    %1 = arith.cmpi eq, %arg3, %c0_i32_0 : i32
    %2 = arith.andi %0, %1 : i1
    %3 = arith.extui %2 : i1 to i32
    %c0_i32_1 = arith.constant 0 : i32
    %4 = arith.cmpi ne, %3, %c0_i32_1 : i32
    scf.if %4 {
      %cst_34 = arith.constant 0.000000e+00 : f32
      %51 = vector.broadcast %cst_34 : f32 to vector<8x32xf32>
      %c0_35 = arith.constant 0 : index
      %c0_36 = arith.constant 0 : index
      %52 = vector.load %arg17[%c0_35, %c0_36] : memref<8x32xf32, #tpu.memory_space<vmem>>, vector<8x32xf32>
      tpu.vector_store %arg17[%c0_35, %c0_36], %51 {strides = array<i32>} : memref<8x32xf32, #tpu.memory_space<vmem>>, vector<8x32xf32>,
    } else {
    }
    %c0_i32_2 = arith.constant 0 : i32
    %5 = arith.cmpi eq, %arg3, %c0_i32_2 : i32
    %6 = arith.extui %5 : i1 to i32
    %c0_i32_3 = arith.constant 0 : i32
    %7 = arith.cmpi ne, %6, %c0_i32_3 : i32
    scf.if %7 {
      %c0_34 = arith.constant 0 : index
      %c0_35 = arith.constant 0 : index
      %c0_36 = arith.constant 0 : index
      %51 = vector.load %arg4[%c0_34, %c0_35, %c0_36] : memref<1x8x32xf32, #tpu.memory_space<vmem>>, vector<1x8x32xf32>
      %52 = vector.shape_cast %51 : vector<1x8x32xf32> to vector<8x32xf32>
      %c0_37 = arith.constant 0 : index
      %c0_38 = arith.constant 0 : index
      %c0_39 = arith.constant 0 : index
      %53 = vector.load %arg6[%c0_37, %c0_38, %c0_39] : memref<1x32x8xf32, #tpu.memory_space<vmem>>, vector<1x32x8xf32>
      %54 = vector.shape_cast %53 : vector<1x32x8xf32> to vector<32x8xf32>
      %cst_40 = arith.constant dense<0.000000e+00> : vector<8x8xf32>
      %55 = tpu.matmul %52, %54, %cst_40 {dimension_numbers = #tpu.dot_dimension_numbers<[1], [0], [0], [1], [0, 0, 1, 1], [], []>} : vector<8x32xf32>, vector<32x8xf32>, vector<8x8xf32> -> vector<8x8xf32>
      %c0_41 = arith.constant 0 : index
      %c0_42 = arith.constant 0 : index
      %c0_43 = arith.constant 0 : index
      %56 = vector.load %arg7[%c0_41, %c0_42, %c0_43] : memref<1x1x8xf32, #tpu.memory_space<vmem>>, vector<1x1x8xf32>
      %57 = vector.shape_cast %56 : vector<1x1x8xf32> to vector<1x8xf32>
      %58 = vector.broadcast %57 : vector<1x8xf32> to vector<8x8xf32>
      %59 = arith.addf %55, %58 : vector<8x8xf32>
      %cst_44 = arith.constant 0.353553385 : f32
      %60 = vector.broadcast %cst_44 : f32 to vector<8x8xf32>
      %61 = arith.mulf %59, %60 : vector<8x8xf32>
      %c0_45 = arith.constant 0 : index
      %c0_46 = arith.constant 0 : index
      %62 = vector.load %arg13[%c0_45, %c0_46] : memref<8x8xf32, #tpu.memory_space<vmem>>, vector<8x8xf32>
      tpu.vector_store %arg13[%c0_45, %c0_46], %61 {strides = array<i32>} : memref<8x8xf32, #tpu.memory_space<vmem>>, vector<8x8xf32>,
      %cst_47 = arith.constant 0xFF800000 : f32
      %63 = vector.broadcast %cst_47 : f32 to vector<8x1xf32>
      %c0_48 = arith.constant 0 : index
      %c0_49 = arith.constant 0 : index
      %64 = vector.load %arg14[%c0_48, %c0_49] : memref<8x1xf32, #tpu.memory_space<vmem>>, vector<8x1xf32>
      tpu.vector_store %arg14[%c0_48, %c0_49], %63 {strides = array<i32>} : memref<8x1xf32, #tpu.memory_space<vmem>>, vector<8x1xf32>,
      %cst_50 = arith.constant 0.000000e+00 : f32
      %65 = vector.broadcast %cst_50 : f32 to vector<8x1xf32>
      %c0_51 = arith.constant 0 : index
      %c0_52 = arith.constant 0 : index
      %66 = vector.load %arg15[%c0_51, %c0_52] : memref<8x1xf32, #tpu.memory_space<vmem>>, vector<8x1xf32>
      tpu.vector_store %arg15[%c0_51, %c0_52], %65 {strides = array<i32>} : memref<8x1xf32, #tpu.memory_space<vmem>>, vector<8x1xf32>,
      %cst_53 = arith.constant 0.000000e+00 : f32
      %67 = vector.broadcast %cst_53 : f32 to vector<8x8xf32>
      %c0_54 = arith.constant 0 : index
      %c0_55 = arith.constant 0 : index
      %68 = vector.load %arg16[%c0_54, %c0_55] : memref<8x8xf32, #tpu.memory_space<vmem>>, vector<8x8xf32>
      tpu.vector_store %arg16[%c0_54, %c0_55], %67 {strides = array<i32>} : memref<8x8xf32, #tpu.memory_space<vmem>>, vector<8x8xf32>,
    } else {
    }
    %c0 = arith.constant 0 : index
    %c0_4 = arith.constant 0 : index
    %c0_5 = arith.constant 0 : index
    %8 = vector.load %arg5[%c0, %c0_4, %c0_5] : memref<1x8x32xf32, #tpu.memory_space<vmem>>, vector<1x8x32xf32>
    %9 = vector.shape_cast %8 : vector<1x8x32xf32> to vector<8x32xf32>
    %c0_6 = arith.constant 0 : index
    %c0_7 = arith.constant 0 : index
    %c0_8 = arith.constant 0 : index
    %10 = vector.load %arg8[%c0_6, %c0_7, %c0_8] : memref<1x32x16xf32, #tpu.memory_space<vmem>>, vector<1x32x16xf32>
    %11 = vector.shape_cast %10 : vector<1x32x16xf32> to vector<32x16xf32>
    %cst = arith.constant dense<0.000000e+00> : vector<8x16xf32>
    %12 = tpu.matmul %9, %11, %cst {dimension_numbers = #tpu.dot_dimension_numbers<[1], [0], [0], [1], [0, 0, 1, 1], [], []>} : vector<8x32xf32>, vector<32x16xf32>, vector<8x16xf32> -> vector<8x16xf32>
    %c0_9 = arith.constant 0 : index
    %c0_10 = arith.constant 0 : index
    %c0_11 = arith.constant 0 : index
    %13 = vector.load %arg9[%c0_9, %c0_10, %c0_11] : memref<1x1x16xf32, #tpu.memory_space<vmem>>, vector<1x1x16xf32>
    %14 = vector.shape_cast %13 : vector<1x1x16xf32> to vector<1x16xf32>
    %15 = vector.broadcast %14 : vector<1x16xf32> to vector<8x16xf32>
    %16 = arith.addf %12, %15 : vector<8x16xf32>
    %17 = vector.extract_strided_slice %16 {offsets = [0, 0], sizes = [8, 8], strides = [1, 1]} : vector<8x16xf32> to vector<8x8xf32>
    %18 = vector.extract_strided_slice %16 {offsets = [0, 8], sizes = [8, 8], strides = [1, 1]} : vector<8x16xf32> to vector<8x8xf32>
    %c0_12 = arith.constant 0 : index
    %c0_13 = arith.constant 0 : index
    %19 = vector.load %arg13[%c0_12, %c0_13] : memref<8x8xf32, #tpu.memory_space<vmem>>, vector<8x8xf32>
    %cst_14 = arith.constant dense<0.000000e+00> : vector<8x8xf32>
    %20 = tpu.matmul %19, %17, %cst_14 {dimension_numbers = #tpu.dot_dimension_numbers<[1], [1], [0], [0], [0, 0, 1, 0], [], []>} : vector<8x8xf32>, vector<8x8xf32>, vector<8x8xf32> -> vector<8x8xf32>
    %c0_15 = arith.constant 0 : index
    %c0_16 = arith.constant 0 : index
    %21 = vector.load %arg14[%c0_15, %c0_16] : memref<8x1xf32, #tpu.memory_space<vmem>>, vector<8x1xf32>
    %cst_17 = arith.constant dense<0xFF800000> : vector<8xf32>
    %22 = vector.multi_reduction <maximumf>, %20, %cst_17 [1] : vector<8x8xf32> to vector<8xf32>
    %23 = vector.shape_cast %22 : vector<8xf32> to vector<8x1xf32>
    %24 = arith.maximumf %21, %23 : vector<8x1xf32>
    %25 = arith.subf %21, %24 : vector<8x1xf32>
    %26 = math.exp %25 : vector<8x1xf32>
    %27 = vector.broadcast %24 : vector<8x1xf32> to vector<8x8xf32>
    %28 = arith.subf %20, %27 : vector<8x8xf32>
    %29 = math.exp %28 : vector<8x8xf32>
    %c0_18 = arith.constant 0 : index
    %c0_19 = arith.constant 0 : index
    %30 = vector.load %arg15[%c0_18, %c0_19] : memref<8x1xf32, #tpu.memory_space<vmem>>, vector<8x1xf32>
    %31 = arith.mulf %26, %30 : vector<8x1xf32>
    %cst_20 = arith.constant dense<0.000000e+00> : vector<8xf32>
    %32 = vector.multi_reduction <add>, %29, %cst_20 [1] : vector<8x8xf32> to vector<8xf32>
    %33 = vector.shape_cast %32 : vector<8xf32> to vector<8x1xf32>
    %34 = arith.addf %31, %33 : vector<8x1xf32>
    %c0_21 = arith.constant 0 : index
    %c0_22 = arith.constant 0 : index
    %35 = vector.load %arg15[%c0_21, %c0_22] : memref<8x1xf32, #tpu.memory_space<vmem>>, vector<8x1xf32>
    tpu.vector_store %arg15[%c0_21, %c0_22], %34 {strides = array<i32>} : memref<8x1xf32, #tpu.memory_space<vmem>>, vector<8x1xf32>,
    %c0_23 = arith.constant 0 : index
    %c0_24 = arith.constant 0 : index
    %36 = vector.load %arg16[%c0_23, %c0_24] : memref<8x8xf32, #tpu.memory_space<vmem>>, vector<8x8xf32>
    %37 = vector.broadcast %26 : vector<8x1xf32> to vector<8x8xf32>
    %38 = arith.mulf %37, %36 : vector<8x8xf32>
    %cst_25 = arith.constant dense<0.000000e+00> : vector<8x8xf32>
    %39 = tpu.matmul %29, %18, %cst_25 {dimension_numbers = #tpu.dot_dimension_numbers<[1], [0], [0], [1], [0, 0, 1, 1], [], []>} : vector<8x8xf32>, vector<8x8xf32>, vector<8x8xf32> -> vector<8x8xf32>
    %40 = arith.addf %38, %39 : vector<8x8xf32>
    %c0_26 = arith.constant 0 : index
    %c0_27 = arith.constant 0 : index
    %41 = vector.load %arg16[%c0_26, %c0_27] : memref<8x8xf32, #tpu.memory_space<vmem>>, vector<8x8xf32>
    tpu.vector_store %arg16[%c0_26, %c0_27], %40 {strides = array<i32>} : memref<8x8xf32, #tpu.memory_space<vmem>>, vector<8x8xf32>,
    %c0_28 = arith.constant 0 : index
    %c0_29 = arith.constant 0 : index
    %42 = vector.load %arg14[%c0_28, %c0_29] : memref<8x1xf32, #tpu.memory_space<vmem>>, vector<8x1xf32>
    tpu.vector_store %arg14[%c0_28, %c0_29], %24 {strides = array<i32>} : memref<8x1xf32, #tpu.memory_space<vmem>>, vector<8x1xf32>,
    %c0_i32_30 = arith.constant 0 : i32
    %43 = arith.cmpi eq, %arg3, %c0_i32_30 : i32
    %44 = arith.extui %43 : i1 to i32
    %c0_i32_31 = arith.constant 0 : i32
    %45 = arith.cmpi ne, %44, %c0_i32_31 : i32
    scf.if %45 {
      %c0_34 = arith.constant 0 : index
      %c0_35 = arith.constant 0 : index
      %51 = vector.load %arg16[%c0_34, %c0_35] : memref<8x8xf32, #tpu.memory_space<vmem>>, vector<8x8xf32>
      %c0_36 = arith.constant 0 : index
      %c0_37 = arith.constant 0 : index
      %52 = vector.load %arg15[%c0_36, %c0_37] : memref<8x1xf32, #tpu.memory_space<vmem>>, vector<8x1xf32>
      %53 = tpu.reciprocal %52 {approx = true} : vector<8x1xf32> -> vector<8x1xf32>
      %54 = vector.broadcast %53 : vector<8x1xf32> to vector<8x8xf32>
      %55 = arith.mulf %51, %54 : vector<8x8xf32>
      %c0_38 = arith.constant 0 : index
      %c0_39 = arith.constant 0 : index
      %56 = vector.load %arg17[%c0_38, %c0_39] : memref<8x32xf32, #tpu.memory_space<vmem>>, vector<8x32xf32>
      %c0_40 = arith.constant 0 : index
      %c0_41 = arith.constant 0 : index
      %c0_42 = arith.constant 0 : index
      %57 = vector.load %arg10[%c0_40, %c0_41, %c0_42] : memref<1x8x32xf32, #tpu.memory_space<vmem>>, vector<1x8x32xf32>
      %58 = vector.shape_cast %57 : vector<1x8x32xf32> to vector<8x32xf32>
      %cst_43 = arith.constant dense<0.000000e+00> : vector<8x32xf32>
      %59 = tpu.matmul %55, %58, %cst_43 {dimension_numbers = #tpu.dot_dimension_numbers<[1], [0], [0], [1], [0, 0, 1, 1], [], []>} : vector<8x8xf32>, vector<8x32xf32>, vector<8x32xf32> -> vector<8x32xf32>
      %60 = arith.addf %56, %59 : vector<8x32xf32>
      %c0_44 = arith.constant 0 : index
      %c0_45 = arith.constant 0 : index
      %61 = vector.load %arg17[%c0_44, %c0_45] : memref<8x32xf32, #tpu.memory_space<vmem>>, vector<8x32xf32>
      tpu.vector_store %arg17[%c0_44, %c0_45], %60 {strides = array<i32>} : memref<8x32xf32, #tpu.memory_space<vmem>>, vector<8x32xf32>,
    } else {
    }
    %c3_i32 = arith.constant 3 : i32
    %46 = arith.cmpi eq, %arg2, %c3_i32 : i32
    %c0_i32_32 = arith.constant 0 : i32
    %47 = arith.cmpi eq, %arg3, %c0_i32_32 : i32
    %48 = arith.andi %46, %47 : i1
    %49 = arith.extui %48 : i1 to i32
    %c0_i32_33 = arith.constant 0 : i32
    %50 = arith.cmpi ne, %49, %c0_i32_33 : i32
    scf.if %50 {
      %c0_34 = arith.constant 0 : index
      %c0_35 = arith.constant 0 : index
      %51 = vector.load %arg17[%c0_34, %c0_35] : memref<8x32xf32, #tpu.memory_space<vmem>>, vector<8x32xf32>
      %c0_36 = arith.constant 0 : index
      %c0_37 = arith.constant 0 : index
      %52 = vector.load %arg11[%c0_36, %c0_37] : memref<1x32xf32, #tpu.memory_space<vmem>>, vector<1x32xf32>
      %53 = vector.broadcast %52 : vector<1x32xf32> to vector<8x32xf32>
      %54 = arith.addf %51, %53 : vector<8x32xf32>
      %c0_38 = arith.constant 0 : index
      %c0_39 = arith.constant 0 : index
      %c0_40 = arith.constant 0 : index
      %55 = vector.load %arg12[%c0_38, %c0_39, %c0_40] : memref<1x8x32xf32, #tpu.memory_space<vmem>>, vector<1x8x32xf32>
      %56 = vector.shape_cast %55 : vector<1x8x32xf32> to vector<8x32xf32>
      %57 = vector.shape_cast %54 : vector<8x32xf32> to vector<1x8x32xf32>
      tpu.vector_store %arg12[%c0_38, %c0_39, %c0_40], %57 {strides = array<i32>} : memref<1x8x32xf32, #tpu.memory_space<vmem>>, vector<1x8x32xf32>,
    } else {
    }
    return
  }
  func.func @transform_0(%arg0: i32, %arg1: i32, %arg2: i32, %arg3: i32) -> (i32, i32, i32) {
    %c0_i32 = arith.constant 0 : i32
    %c0_i32_0 = arith.constant 0 : i32
    return %arg0, %arg1, %c0_i32 : i32, i32, i32
  }
  func.func @transform_1(%arg0: i32, %arg1: i32, %arg2: i32, %arg3: i32) -> (i32, i32, i32) {
    %c0_i32 = arith.constant 0 : i32
    %c0_i32_0 = arith.constant 0 : i32
    return %arg0, %arg3, %c0_i32 : i32, i32, i32
  }
  func.func @transform_2(%arg0: i32, %arg1: i32, %arg2: i32, %arg3: i32) -> (i32, i32, i32) {
    %c0_i32 = arith.constant 0 : i32
    %c0_i32_0 = arith.constant 0 : i32
    %c0_i32_1 = arith.constant 0 : i32
    return %arg2, %c0_i32, %c0_i32_0 : i32, i32, i32
  }
  func.func @transform_3(%arg0: i32, %arg1: i32, %arg2: i32, %arg3: i32) -> (i32, i32, i32) {
    %c0_i32 = arith.constant 0 : i32
    %c0_i32_0 = arith.constant 0 : i32
    %c0_i32_1 = arith.constant 0 : i32
    return %arg2, %c0_i32, %c0_i32_0 : i32, i32, i32
  }
  func.func @transform_4(%arg0: i32, %arg1: i32, %arg2: i32, %arg3: i32) -> (i32, i32, i32) {
    %c0_i32 = arith.constant 0 : i32
    %c0_i32_0 = arith.constant 0 : i32
    %c0_i32_1 = arith.constant 0 : i32
    return %arg2, %c0_i32, %c0_i32_0 : i32, i32, i32
  }
  func.func @transform_5(%arg0: i32, %arg1: i32, %arg2: i32, %arg3: i32) -> (i32, i32, i32) {
    %c0_i32 = arith.constant 0 : i32
    %c0_i32_0 = arith.constant 0 : i32
    %c0_i32_1 = arith.constant 0 : i32
    return %arg2, %c0_i32, %c0_i32_0 : i32, i32, i32
  }
  func.func @transform_6(%arg0: i32, %arg1: i32, %arg2: i32, %arg3: i32) -> (i32, i32, i32) {
    %c0_i32 = arith.constant 0 : i32
    %c0_i32_0 = arith.constant 0 : i32
    %c0_i32_1 = arith.constant 0 : i32
    return %arg2, %c0_i32, %c0_i32_0 : i32, i32, i32
  }
  func.func @transform_7(%arg0: i32, %arg1: i32, %arg2: i32, %arg3: i32) -> (i32, i32) {
    %c0_i32 = arith.constant 0 : i32
    %c0_i32_0 = arith.constant 0 : i32
    %c0_i32_1 = arith.constant 0 : i32
    return %c0_i32, %c0_i32_0 : i32, i32
  }
  func.func @transform_8(%arg0: i32, %arg1: i32, %arg2: i32, %arg3: i32) -> (i32, i32, i32) {
    %c0_i32 = arith.constant 0 : i32
    %c0_i32_0 = arith.constant 0 : i32
    return %arg0, %arg1, %c0_i32 : i32, i32, i32
  }
}

module attributes {stable_mosaic.version = 11 : i64} {
  func.func @_attn_kernel(%arg0: i32, %arg1: i32, %arg2: i32, %arg3: i32, %arg4: memref<1x8x32xf32, #tpu.memory_space<vmem>>, %arg5: memref<1x8x32xf32, #tpu.memory_space<vmem>>, %arg6: memref<1x32x8xf32, #tpu.memory_space<vmem>>, %arg7: memref<1x1x8xf32, #tpu.memory_space<vmem>>, %arg8: memref<1x32x16xf32, #tpu.memory_space<vmem>>, %arg9: memref<1x1x16xf32, #tpu.memory_space<vmem>>, %arg10: memref<1x8x32xf32, #tpu.memory_space<vmem>>, %arg11: memref<1x32xf32, #tpu.memory_space<vmem>>, %arg12: memref<1x8x32xf32, #tpu.memory_space<vmem>>, %arg13: memref<8x8xf32, #tpu.memory_space<vmem>>, %arg14: memref<8x1xf32, #tpu.memory_space<vmem>>, %arg15: memref<8x1xf32, #tpu.memory_space<vmem>>, %arg16: memref<8x8xf32, #tpu.memory_space<vmem>>, %arg17: memref<8x32xf32, #tpu.memory_space<vmem>>) attributes {dimension_semantics = [#tpu.dimension_semantics<parallel>, #tpu.dimension_semantics<parallel>, #tpu.dimension_semantics<arbitrary>, #tpu.dimension_semantics<arbitrary>], iteration_bounds = array<i64: 2, 1, 4, 1>, scalar_prefetch = 0 : i64, scratch_operands = 5 : i64, tpu.core_type = #tpu.core_type<tc>, window_params = [{transform_indices = @transform_0, window_bounds = array<i64: 1, 8, 32>}, {transform_indices = @transform_1, window_bounds = array<i64: 1, 8, 32>}, {transform_indices = @transform_2, window_bounds = array<i64: 1, 32, 8>}, {transform_indices = @transform_3, window_bounds = array<i64: 1, 1, 8>}, {transform_indices = @transform_4, window_bounds = array<i64: 1, 32, 16>}, {transform_indices = @transform_5, window_bounds = array<i64: 1, 1, 16>}, {transform_indices = @transform_6, window_bounds = array<i64: 1, 8, 32>}, {pipeline_mode = #tpu.pipeline_mode<synchronous>, transform_indices = @transform_7, window_bounds = array<i64: 1, 32>}, {transform_indices = @transform_8, window_bounds = array<i64: 1, 8, 32>}]} {
    %c0_i32 = arith.constant 0 : i32
    %0 = arith.cmpi eq, %arg2, %c0_i32 : i32
    %c0_i32_0 = arith.constant 0 : i32
    %1 = arith.cmpi eq, %arg3, %c0_i32_0 : i32
    %2 = arith.andi %0, %1 : i1
    %3 = arith.extui %2 : i1 to i32
    %c0_i32_1 = arith.constant 0 : i32
    %4 = arith.cmpi ne, %3, %c0_i32_1 : i32
    scf.if %4 {
      %cst_34 = arith.constant 0.000000e+00 : f32
      %51 = vector.broadcast %cst_34 : f32 to vector<8x32xf32>
      %c0_35 = arith.constant 0 : index
      %c0_36 = arith.constant 0 : index
      %52 = vector.load %arg17[%c0_35, %c0_36] : memref<8x32xf32, #tpu.memory_space<vmem>>, vector<8x32xf32>
      tpu.vector_store %arg17[%c0_35, %c0_36], %51 {strides = array<i32>} : memref<8x32xf32, #tpu.memory_space<vmem>>, vector<8x32xf32>,
    } else {
    }
    %c0_i32_2 = arith.constant 0 : i32
    %5 = arith.cmpi eq, %arg3, %c0_i32_2 : i32
    %6 = arith.extui %5 : i1 to i32
    %c0_i32_3 = arith.constant 0 : i32
    %7 = arith.cmpi ne, %6, %c0_i32_3 : i32
    scf.if %7 {
      %c0_34 = arith.constant 0 : index
      %c0_35 = arith.constant 0 : index
      %c0_36 = arith.constant 0 : index
      %51 = vector.load %arg4[%c0_34, %c0_35, %c0_36] : memref<1x8x32xf32, #tpu.memory_space<vmem>>, vector<1x8x32xf32>
      %52 = vector.shape_cast %51 : vector<1x8x32xf32> to vector<8x32xf32>
      %c0_37 = arith.constant 0 : index
      %c0_38 = arith.constant 0 : index
      %c0_39 = arith.constant 0 : index
      %53 = vector.load %arg6[%c0_37, %c0_38, %c0_39] : memref<1x32x8xf32, #tpu.memory_space<vmem>>, vector<1x32x8xf32>
      %54 = vector.shape_cast %53 : vector<1x32x8xf32> to vector<32x8xf32>
      %cst_40 = arith.constant dense<0.000000e+00> : vector<8x8xf32>
      %55 = tpu.matmul %52, %54, %cst_40 {dimension_numbers = #tpu.dot_dimension_numbers<[1], [0], [0], [1], [0, 0, 1, 1], [], []>} : vector<8x32xf32>, vector<32x8xf32>, vector<8x8xf32> -> vector<8x8xf32>
      %c0_41 = arith.constant 0 : index
      %c0_42 = arith.constant 0 : index
      %c0_43 = arith.constant 0 : index
      %56 = vector.load %arg7[%c0_41, %c0_42, %c0_43] : memref<1x1x8xf32, #tpu.memory_space<vmem>>, vector<1x1x8xf32>
      %57 = vector.shape_cast %56 : vector<1x1x8xf32> to vector<1x8xf32>
      %58 = vector.broadcast %57 : vector<1x8xf32> to vector<8x8xf32>
      %59 = arith.addf %55, %58 : vector<8x8xf32>
      %cst_44 = arith.constant 0.353553385 : f32
      %60 = vector.broadcast %cst_44 : f32 to vector<8x8xf32>
      %61 = arith.mulf %59, %60 : vector<8x8xf32>
      %c0_45 = arith.constant 0 : index
      %c0_46 = arith.constant 0 : index
      %62 = vector.load %arg13[%c0_45, %c0_46] : memref<8x8xf32, #tpu.memory_space<vmem>>, vector<8x8xf32>
      tpu.vector_store %arg13[%c0_45, %c0_46], %61 {strides = array<i32>} : memref<8x8xf32, #tpu.memory_space<vmem>>, vector<8x8xf32>,
      %cst_47 = arith.constant 0xFF800000 : f32
      %63 = vector.broadcast %cst_47 : f32 to vector<8x1xf32>
      %c0_48 = arith.constant 0 : index
      %c0_49 = arith.constant 0 : index
      %64 = vector.load %arg14[%c0_48, %c0_49] : memref<8x1xf32, #tpu.memory_space<vmem>>, vector<8x1xf32>
      tpu.vector_store %arg14[%c0_48, %c0_49], %63 {strides = array<i32>} : memref<8x1xf32, #tpu.memory_space<vmem>>, vector<8x1xf32>,
      %cst_50 = arith.constant 0.000000e+00 : f32
      %65 = vector.broadcast %cst_50 : f32 to vector<8x1xf32>
      %c0_51 = arith.constant 0 : index
      %c0_52 = arith.constant 0 : index
      %66 = vector.load %arg15[%c0_51, %c0_52] : memref<8x1xf32, #tpu.memory_space<vmem>>, vector<8x1xf32>
      tpu.vector_store %arg15[%c0_51, %c0_52], %65 {strides = array<i32>} : memref<8x1xf32, #tpu.memory_space<vmem>>, vector<8x1xf32>,
      %cst_53 = arith.constant 0.000000e+00 : f32
      %67 = vector.broadcast %cst_53 : f32 to vector<8x8xf32>
      %c0_54 = arith.constant 0 : index
      %c0_55 = arith.constant 0 : index
      %68 = vector.load %arg16[%c0_54, %c0_55] : memref<8x8xf32, #tpu.memory_space<vmem>>, vector<8x8xf32>
      tpu.vector_store %arg16[%c0_54, %c0_55], %67 {strides = array<i32>} : memref<8x8xf32, #tpu.memory_space<vmem>>, vector<8x8xf32>,
    } else {
    }
    %c0 = arith.constant 0 : index
    %c0_4 = arith.constant 0 : index
    %c0_5 = arith.constant 0 : index
    %8 = vector.load %arg5[%c0, %c0_4, %c0_5] : memref<1x8x32xf32, #tpu.memory_space<vmem>>, vector<1x8x32xf32>
    %9 = vector.shape_cast %8 : vector<1x8x32xf32> to vector<8x32xf32>
    %c0_6 = arith.constant 0 : index
    %c0_7 = arith.constant 0 : index
    %c0_8 = arith.constant 0 : index
    %10 = vector.load %arg8[%c0_6, %c0_7, %c0_8] : memref<1x32x16xf32, #tpu.memory_space<vmem>>, vector<1x32x16xf32>
    %11 = vector.shape_cast %10 : vector<1x32x16xf32> to vector<32x16xf32>
    %cst = arith.constant dense<0.000000e+00> : vector<8x16xf32>
    %12 = tpu.matmul %9, %11, %cst {dimension_numbers = #tpu.dot_dimension_numbers<[1], [0], [0], [1], [0, 0, 1, 1], [], []>} : vector<8x32xf32>, vector<32x16xf32>, vector<8x16xf32> -> vector<8x16xf32>
    %c0_9 = arith.constant 0 : index
    %c0_10 = arith.constant 0 : index
    %c0_11 = arith.constant 0 : index
    %13 = vector.load %arg9[%c0_9, %c0_10, %c0_11] : memref<1x1x16xf32, #tpu.memory_space<vmem>>, vector<1x1x16xf32>
    %14 = vector.shape_cast %13 : vector<1x1x16xf32> to vector<1x16xf32>
    %15 = vector.broadcast %14 : vector<1x16xf32> to vector<8x16xf32>
    %16 = arith.addf %12, %15 : vector<8x16xf32>
    %17 = vector.extract_strided_slice %16 {offsets = [0, 0], sizes = [8, 8], strides = [1, 1]} : vector<8x16xf32> to vector<8x8xf32>
    %18 = vector.extract_strided_slice %16 {offsets = [0, 8], sizes = [8, 8], strides = [1, 1]} : vector<8x16xf32> to vector<8x8xf32>
    %c0_12 = arith.constant 0 : index
    %c0_13 = arith.constant 0 : index
    %19 = vector.load %arg13[%c0_12, %c0_13] : memref<8x8xf32, #tpu.memory_space<vmem>>, vector<8x8xf32>
    %cst_14 = arith.constant dense<0.000000e+00> : vector<8x8xf32>
    %20 = tpu.matmul %19, %17, %cst_14 {dimension_numbers = #tpu.dot_dimension_numbers<[1], [1], [0], [0], [0, 0, 1, 0], [], []>} : vector<8x8xf32>, vector<8x8xf32>, vector<8x8xf32> -> vector<8x8xf32>
    %c0_15 = arith.constant 0 : index
    %c0_16 = arith.constant 0 : index
    %21 = vector.load %arg14[%c0_15, %c0_16] : memref<8x1xf32, #tpu.memory_space<vmem>>, vector<8x1xf32>
    %cst_17 = arith.constant dense<0xFF800000> : vector<8xf32>
    %22 = vector.multi_reduction <maximumf>, %20, %cst_17 [1] : vector<8x8xf32> to vector<8xf32>
    %23 = vector.shape_cast %22 : vector<8xf32> to vector<8x1xf32>
    %24 = arith.maximumf %21, %23 : vector<8x1xf32>
    %25 = arith.subf %21, %24 : vector<8x1xf32>
    %26 = math.exp %25 : vector<8x1xf32>
    %27 = vector.broadcast %24 : vector<8x1xf32> to vector<8x8xf32>
    %28 = arith.subf %20, %27 : vector<8x8xf32>
    %29 = math.exp %28 : vector<8x8xf32>
    %c0_18 = arith.constant 0 : index
    %c0_19 = arith.constant 0 : index
    %30 = vector.load %arg15[%c0_18, %c0_19] : memref<8x1xf32, #tpu.memory_space<vmem>>, vector<8x1xf32>
    %31 = arith.mulf %26, %30 : vector<8x1xf32>
    %cst_20 = arith.constant dense<0.000000e+00> : vector<8xf32>
    %32 = vector.multi_reduction <add>, %29, %cst_20 [1] : vector<8x8xf32> to vector<8xf32>
    %33 = vector.shape_cast %32 : vector<8xf32> to vector<8x1xf32>
    %34 = arith.addf %31, %33 : vector<8x1xf32>
    %c0_21 = arith.constant 0 : index
    %c0_22 = arith.constant 0 : index
    %35 = vector.load %arg15[%c0_21, %c0_22] : memref<8x1xf32, #tpu.memory_space<vmem>>, vector<8x1xf32>
    tpu.vector_store %arg15[%c0_21, %c0_22], %34 {strides = array<i32>} : memref<8x1xf32, #tpu.memory_space<vmem>>, vector<8x1xf32>,
    %c0_23 = arith.constant 0 : index
    %c0_24 = arith.constant 0 : index
    %36 = vector.load %arg16[%c0_23, %c0_24] : memref<8x8xf32, #tpu.memory_space<vmem>>, vector<8x8xf32>
    %37 = vector.broadcast %26 : vector<8x1xf32> to vector<8x8xf32>
    %38 = arith.mulf %37, %36 : vector<8x8xf32>
    %cst_25 = arith.constant dense<0.000000e+00> : vector<8x8xf32>
    %39 = tpu.matmul %29, %18, %cst_25 {dimension_numbers = #tpu.dot_dimension_numbers<[1], [0], [0], [1], [0, 0, 1, 1], [], []>} : vector<8x8xf32>, vector<8x8xf32>, vector<8x8xf32> -> vector<8x8xf32>
    %40 = arith.addf %38, %39 : vector<8x8xf32>
    %c0_26 = arith.constant 0 : index
    %c0_27 = arith.constant 0 : index
    %41 = vector.load %arg16[%c0_26, %c0_27] : memref<8x8xf32, #tpu.memory_space<vmem>>, vector<8x8xf32>
    tpu.vector_store %arg16[%c0_26, %c0_27], %40 {strides = array<i32>} : memref<8x8xf32, #tpu.memory_space<vmem>>, vector<8x8xf32>,
    %c0_28 = arith.constant 0 : index
    %c0_29 = arith.constant 0 : index
    %42 = vector.load %arg14[%c0_28, %c0_29] : memref<8x1xf32, #tpu.memory_space<vmem>>, vector<8x1xf32>
    tpu.vector_store %arg14[%c0_28, %c0_29], %24 {strides = array<i32>} : memref<8x1xf32, #tpu.memory_space<vmem>>, vector<8x1xf32>,
    %c0_i32_30 = arith.constant 0 : i32
    %43 = arith.cmpi eq, %arg3, %c0_i32_30 : i32
    %44 = arith.extui %43 : i1 to i32
    %c0_i32_31 = arith.constant 0 : i32
    %45 = arith.cmpi ne, %44, %c0_i32_31 : i32
    scf.if %45 {
      %c0_34 = arith.constant 0 : index
      %c0_35 = arith.constant 0 : index
      %51 = vector.load %arg16[%c0_34, %c0_35] : memref<8x8xf32, #tpu.memory_space<vmem>>, vector<8x8xf32>
      %c0_36 = arith.constant 0 : index
      %c0_37 = arith.constant 0 : index
      %52 = vector.load %arg15[%c0_36, %c0_37] : memref<8x1xf32, #tpu.memory_space<vmem>>, vector<8x1xf32>
      %53 = tpu.reciprocal %52 {approx = true} : vector<8x1xf32> -> vector<8x1xf32>
      %54 = vector.broadcast %53 : vector<8x1xf32> to vector<8x8xf32>
      %55 = arith.mulf %51, %54 : vector<8x8xf32>
      %c0_38 = arith.constant 0 : index
      %c0_39 = arith.constant 0 : index
      %56 = vector.load %arg17[%c0_38, %c0_39] : memref<8x32xf32, #tpu.memory_space<vmem>>, vector<8x32xf32>
      %c0_40 = arith.constant 0 : index
      %c0_41 = arith.constant 0 : index
      %c0_42 = arith.constant 0 : index
      %57 = vector.load %arg10[%c0_40, %c0_41, %c0_42] : memref<1x8x32xf32, #tpu.memory_space<vmem>>, vector<1x8x32xf32>
      %58 = vector.shape_cast %57 : vector<1x8x32xf32> to vector<8x32xf32>
      %cst_43 = arith.constant dense<0.000000e+00> : vector<8x32xf32>
      %59 = tpu.matmul %55, %58, %cst_43 {dimension_numbers = #tpu.dot_dimension_numbers<[1], [0], [0], [1], [0, 0, 1, 1], [], []>} : vector<8x8xf32>, vector<8x32xf32>, vector<8x32xf32> -> vector<8x32xf32>
      %60 = arith.addf %56, %59 : vector<8x32xf32>
      %c0_44 = arith.constant 0 : index
      %c0_45 = arith.constant 0 : index
      %61 = vector.load %arg17[%c0_44, %c0_45] : memref<8x32xf32, #tpu.memory_space<vmem>>, vector<8x32xf32>
      tpu.vector_store %arg17[%c0_44, %c0_45], %60 {strides = array<i32>} : memref<8x32xf32, #tpu.memory_space<vmem>>, vector<8x32xf32>,
    } else {
    }
    %c3_i32 = arith.constant 3 : i32
    %46 = arith.cmpi eq, %arg2, %c3_i32 : i32
    %c0_i32_32 = arith.constant 0 : i32
    %47 = arith.cmpi eq, %arg3, %c0_i32_32 : i32
    %48 = arith.andi %46, %47 : i1
    %49 = arith.extui %48 : i1 to i32
    %c0_i32_33 = arith.constant 0 : i32
    %50 = arith.cmpi ne, %49, %c0_i32_33 : i32
    scf.if %50 {
      %c0_34 = arith.constant 0 : index
      %c0_35 = arith.constant 0 : index
      %51 = vector.load %arg17[%c0_34, %c0_35] : memref<8x32xf32, #tpu.memory_space<vmem>>, vector<8x32xf32>
      %c0_36 = arith.constant 0 : index
      %c0_37 = arith.constant 0 : index
      %52 = vector.load %arg11[%c0_36, %c0_37] : memref<1x32xf32, #tpu.memory_space<vmem>>, vector<1x32xf32>
      %53 = vector.broadcast %52 : vector<1x32xf32> to vector<8x32xf32>
      %54 = arith.addf %51, %53 : vector<8x32xf32>
      %c0_38 = arith.constant 0 : index
      %c0_39 = arith.constant 0 : index
      %c0_40 = arith.constant 0 : index
      %55 = vector.load %arg12[%c0_38, %c0_39, %c0_40] : memref<1x8x32xf32, #tpu.memory_space<vmem>>, vector<1x8x32xf32>
      %56 = vector.shape_cast %55 : vector<1x8x32xf32> to vector<8x32xf32>
      %57 = vector.shape_cast %54 : vector<8x32xf32> to vector<1x8x32xf32>
      tpu.vector_store %arg12[%c0_38, %c0_39, %c0_40], %57 {strides = array<i32>} : memref<1x8x32xf32, #tpu.memory_space<vmem>>, vector<1x8x32xf32>,
    } else {
    }
    return
  }
  func.func @transform_0(%arg0: i32, %arg1: i32, %arg2: i32, %arg3: i32) -> (i32, i32, i32) {
    %c0_i32 = arith.constant 0 : i32
    %c0_i32_0 = arith.constant 0 : i32
    return %arg0, %arg1, %c0_i32 : i32, i32, i32
  }
  func.func @transform_1(%arg0: i32, %arg1: i32, %arg2: i32, %arg3: i32) -> (i32, i32, i32) {
    %c0_i32 = arith.constant 0 : i32
    %c0_i32_0 = arith.constant 0 : i32
    return %arg0, %arg3, %c0_i32 : i32, i32, i32
  }
  func.func @transform_2(%arg0: i32, %arg1: i32, %arg2: i32, %arg3: i32) -> (i32, i32, i32) {
    %c0_i32 = arith.constant 0 : i32
    %c0_i32_0 = arith.constant 0 : i32
    %c0_i32_1 = arith.constant 0 : i32
    return %arg2, %c0_i32, %c0_i32_0 : i32, i32, i32
  }
  func.func @transform_3(%arg0: i32, %arg1: i32, %arg2: i32, %arg3: i32) -> (i32, i32, i32) {
    %c0_i32 = arith.constant 0 : i32
    %c0_i32_0 = arith.constant 0 : i32
    %c0_i32_1 = arith.constant 0 : i32
    return %arg2, %c0_i32, %c0_i32_0 : i32, i32, i32
  }
  func.func @transform_4(%arg0: i32, %arg1: i32, %arg2: i32, %arg3: i32) -> (i32, i32, i32) {
    %c0_i32 = arith.constant 0 : i32
    %c0_i32_0 = arith.constant 0 : i32
    %c0_i32_1 = arith.constant 0 : i32
    return %arg2, %c0_i32, %c0_i32_0 : i32, i32, i32
  }
  func.func @transform_5(%arg0: i32, %arg1: i32, %arg2: i32, %arg3: i32) -> (i32, i32, i32) {
    %c0_i32 = arith.constant 0 : i32
    %c0_i32_0 = arith.constant 0 : i32
    %c0_i32_1 = arith.constant 0 : i32
    return %arg2, %c0_i32, %c0_i32_0 : i32, i32, i32
  }
  func.func @transform_6(%arg0: i32, %arg1: i32, %arg2: i32, %arg3: i32) -> (i32, i32, i32) {
    %c0_i32 = arith.constant 0 : i32
    %c0_i32_0 = arith.constant 0 : i32
    %c0_i32_1 = arith.constant 0 : i32
    return %arg2, %c0_i32, %c0_i32_0 : i32, i32, i32
  }
  func.func @transform_7(%arg0: i32, %arg1: i32, %arg2: i32, %arg3: i32) -> (i32, i32) {
    %c0_i32 = arith.constant 0 : i32
    %c0_i32_0 = arith.constant 0 : i32
    %c0_i32_1 = arith.constant 0 : i32
    return %c0_i32, %c0_i32_0 : i32, i32
  }
  func.func @transform_8(%arg0: i32, %arg1: i32, %arg2: i32, %arg3: i32) -> (i32, i32, i32) {
    %c0_i32 = arith.constant 0 : i32
    %c0_i32_0 = arith.constant 0 : i32
    return %arg0, %arg1, %c0_i32 : i32, i32, i32
  }
}

</mosaic_0001>

<llo_original>
// kernel: tpu_custom_call.1
$region0: #{tpu_custom_call.1}
  #allocation0 [shape = 'u32[]', space=smem, size = 0x4, offset = 0x4, fixed_abs, tag = 'smem constant byte address 0x4 - core index']
  #allocation1 [shape = 'u32[144,128]{1,0:T(1,128)}', space=vmem, size = 0x12000, scoped, tag = 'internal scratch']
  #allocation2 [shape = 'f32[8,8]{1,0:T(8,128)}', space=vmem, size = 0x1000, scoped, tag = 'scratch operand']
  #allocation3 [shape = 'f32[8,1]{1,0:T(8,128)}', space=vmem, size = 0x1000, scoped, tag = 'scratch operand']
  #allocation4 [shape = 'f32[8,1]{1,0:T(8,128)}', space=vmem, size = 0x1000, scoped, tag = 'scratch operand']
  #allocation5 [shape = 'f32[8,8]{1,0:T(8,128)}', space=vmem, size = 0x1000, scoped, tag = 'scratch operand']
  #allocation6 [shape = 'f32[8,32]{1,0:T(8,128)}', space=vmem, size = 0x1000, scoped, tag = 'scratch operand']
  %s0 = inlined_call_operand.vmem [shape: f32[2,8,32], index: 0, kind: input, shape index: {}]
  %s1 = inlined_call_operand.vmem [shape: f32[2,8,32], index: 1, kind: input, shape index: {}]
  %s2 = inlined_call_operand.vmem [shape: f32[4,32,8], index: 2, kind: input, shape index: {}]
  %s3 = inlined_call_operand.vmem [shape: f32[4,1,8], index: 3, kind: input, shape index: {}]
  %s4 = inlined_call_operand.vmem [shape: f32[4,32,16], index: 4, kind: input, shape index: {}]
  %s5 = inlined_call_operand.vmem [shape: f32[4,1,16], index: 5, kind: input, shape index: {}]
  %s6 = inlined_call_operand.vmem [shape: f32[4,8,32], index: 6, kind: input, shape index: {}]
  %s7 = inlined_call_operand.vmem [shape: f32[1,32], index: 7, kind: input, shape index: {}]
  %s8 = inlined_call_operand.hbm [shape: f32[2,8,32], index: 8, kind: output, shape index: {}]
  %s9 = sld [smem:[#allocation0]]
  $region81: #{tpu_custom_call.1} parent=0
    _
  %s11 = ssub.s32 1, %s9
  %s12 = scalar_select 0, %s11, %s9
  $region1: #{tpu_custom_call.1} parent=0
    #allocation7 [shape = 'u8[8192]{0}', space=vmem, size = 0x2000, scoped, tag = 'output window, operand 0']
    #allocation8 [shape = 's32[2]{0}', space=sflag, size = 0x8, scoped, tag = 'scoped memory for tpu_custom_call.1']
    %13 = vsyncpa [#allocation8], 0
    %s14 = scalar_lea.sflag [#allocation8], 1
    %15 = vsyncpa %s14, 0
    loop: start=0, step=1, limit=10
    $region2: #{tpu_custom_call.1} parent=1 // loop_pre_header
      _
    $region3: #{tpu_custom_call.1} parent=1 // loop_header
      %s17 = sphi 0, %s21
      %p18 = scmp.ge.s32.totalorder %s17, 10
      %s24 = sphi 0, %s50
      %s25 = sphi 0, %s46
      %s26 = sphi 0, %s42
      %s27 = sphi 0, %s38
      %s28 = sphi 0, %s24
      %s29 = sphi 0, %s25
      %s30 = sphi 0, %s26
      %s31 = sphi 0, %s27
      %s32 = sphi 0, %s28
      %s33 = sphi 0, %s29
      %s34 = sphi 0, %s30
      %s35 = sphi 0, %s31
      %s55 = sphi 0, %s57
      %s58 = sphi 0, %s55
      %s59 = sphi 0, %s58
      %s75 = sphi 0, %s59
      %s83 = sphi 0, %s85
      %s86 = sphi 0, %s83
      %s87 = sphi 0, %s86
      %s103 = sphi 0, %s87
      %s109 = sphi 0, %s111
      %s112 = sphi 0, %s109
      %s113 = sphi 0, %s112
      %s129 = sphi 0, %s113
      %s135 = sphi 0, %s137
      %s138 = sphi 0, %s135
      %s139 = sphi 0, %s138
      %s155 = sphi 0, %s139
      %s161 = sphi 0, %s163
      %s164 = sphi 0, %s161
      %s165 = sphi 0, %s164
      %s181 = sphi 0, %s165
      %s187 = sphi 0, %s189
      %s190 = sphi 0, %s187
      %s191 = sphi 0, %s190
      %s207 = sphi 0, %s191
      %s213 = sphi 0, %s215
      %s216 = sphi 0, %s213
      %s217 = sphi 0, %s216
      %s233 = sphi 0, %s217
      %s237 = sphi 0, %s237
      %s239 = sphi 0, %s237
      %s240 = sphi 0, %s239
      %s254 = sphi 0, %s240
      %s262 = sphi 0, %s264
      %s265 = sphi 0, %s262
      %s266 = sphi 0, %s265
      %s282 = sphi 0, %s266
    $region4: #{tpu_custom_call.1} parent=1 // loop_header_branch
      %20 = sbr.rel (%p18) target = $region8
    $region5: #{tpu_custom_call.1} parent=1 // loop_body
      %s22 = ssub.s32 %s17, 1
      %s23 = ssub.s32 %s17, 2
      %s36 = sadd.s32 1, %s27
      %p37 = scmp.ge.s32.totalorder %s36, 1
      %s38 = scalar_select %p37, 0, %s36
      %s39 = sadd.s32 1, %s26
      %s40 = scalar_select %p37, %s39, %s26
      %p41 = scmp.ge.s32.totalorder %s40, 4
      %s42 = scalar_select %p41, 0, %s40
      %s43 = sadd.s32 1, %s25
      %s44 = scalar_select %p41, %s43, %s25
      %p45 = scmp.ge.s32.totalorder %s44, 1
      %s46 = scalar_select %p45, 0, %s44
      %s47 = sadd.s32 1, %s24
      %s48 = scalar_select %p45, %s47, %s24
      %p49 = scmp.ge.s32.totalorder %s48, 2
      %s50 = scalar_select %p49, 0, %s48
      %s51 = ssub.s32 %s24, %s50
      %s52 = ssub.s32 %s25, %s46
      %s53 = sor.u32 %s51, %s52
      %p54 = scmp.eq.s32.totalorder %s53, 0
      %s56 = sadd.s32 %s55, 1
      %s57 = scalar_select %p54, %s55, %s56
      %p60 = pneg %p54
      %p61 = scmp.eq.s32.totalorder %s17, 7
      %p62 = por %p60, %p61
      %p63 = scmp.ne.s32.totalorder %s55, %s58
      %p64 = scmp.eq.s32.totalorder %s17, 0
      %p65 = por %p63, %p64
      %p66 = scmp.ne.s32.totalorder %s55, %s58
      %p67 = scmp.eq.s32.totalorder %s22, 7
      %p68 = por %p66, %p67
      %p69 = scmp.ne.s32.totalorder %s58, %s59
      %p70 = scmp.eq.s32.totalorder %s22, 0
      %p71 = por %p69, %p70
      %p72 = scmp.ne.s32.totalorder %s58, %s59
      %p73 = scmp.eq.s32.totalorder %s23, 7
      %p74 = por %p72, %p73
      %p76 = scmp.ne.s32.totalorder %s59, %s75
      %p77 = scmp.eq.s32.totalorder %s23, 0
      %p78 = por %p76, %p77
      %s79 = ssub.s32 %s24, %s50
      %s80 = ssub.s32 %s27, %s38
      %s81 = sor.u32 %s79, %s80
      %p82 = scmp.eq.s32.totalorder %s81, 0
      %s84 = sadd.s32 %s83, 1
      %s85 = scalar_select %p82, %s83, %s84
      %p88 = pneg %p82
      %p89 = scmp.eq.s32.totalorder %s17, 7
      %p90 = por %p88, %p89
      %p91 = scmp.ne.s32.totalorder %s83, %s86
      %p92 = scmp.eq.s32.totalorder %s17, 0
      %p93 = por %p91, %p92
      %p94 = scmp.ne.s32.totalorder %s83, %s86
      %p95 = scmp.eq.s32.totalorder %s22, 7
      %p96 = por %p94, %p95
      %p97 = scmp.ne.s32.totalorder %s86, %s87
      %p98 = scmp.eq.s32.totalorder %s22, 0
      %p99 = por %p97, %p98
      %p100 = scmp.ne.s32.totalorder %s86, %s87
      %p101 = scmp.eq.s32.totalorder %s23, 7
      %p102 = por %p100, %p101
      %p104 = scmp.ne.s32.totalorder %s87, %s103
      %p105 = scmp.eq.s32.totalorder %s23, 0
      %p106 = por %p104, %p105
      %s107 = ssub.s32 %s26, %s42
      %p108 = scmp.eq.s32.totalorder %s107, 0
      %s110 = sadd.s32 %s109, 1
      %s111 = scalar_select %p108, %s109, %s110
      %p114 = pneg %p108
      %p115 = scmp.eq.s32.totalorder %s17, 7
      %p116 = por %p114, %p115
      %p117 = scmp.ne.s32.totalorder %s109, %s112
      %p118 = scmp.eq.s32.totalorder %s17, 0
      %p119 = por %p117, %p118
      %p120 = scmp.ne.s32.totalorder %s109, %s112
      %p121 = scmp.eq.s32.totalorder %s22, 7
      %p122 = por %p120, %p121
      %p123 = scmp.ne.s32.totalorder %s112, %s113
      %p124 = scmp.eq.s32.totalorder %s22, 0
      %p125 = por %p123, %p124
      %p126 = scmp.ne.s32.totalorder %s112, %s113
      %p127 = scmp.eq.s32.totalorder %s23, 7
      %p128 = por %p126, %p127
      %p130 = scmp.ne.s32.totalorder %s113, %s129
      %p131 = scmp.eq.s32.totalorder %s23, 0
      %p132 = por %p130, %p131
      %s133 = ssub.s32 %s26, %s42
      %p134 = scmp.eq.s32.totalorder %s133, 0
      %s136 = sadd.s32 %s135, 1
      %s137 = scalar_select %p134, %s135, %s136
      %p140 = pneg %p134
      %p141 = scmp.eq.s32.totalorder %s17, 7
      %p142 = por %p140, %p141
      %p143 = scmp.ne.s32.totalorder %s135, %s138
      %p144 = scmp.eq.s32.totalorder %s17, 0
      %p145 = por %p143, %p144
      %p146 = scmp.ne.s32.totalorder %s135, %s138
      %p147 = scmp.eq.s32.totalorder %s22, 7
      %p148 = por %p146, %p147
      %p149 = scmp.ne.s32.totalorder %s138, %s139
      %p150 = scmp.eq.s32.totalorder %s22, 0
      %p151 = por %p149, %p150
      %p152 = scmp.ne.s32.totalorder %s138, %s139
      %p153 = scmp.eq.s32.totalorder %s23, 7
      %p154 = por %p152, %p153
      %p156 = scmp.ne.s32.totalorder %s139, %s155
      %p157 = scmp.eq.s32.totalorder %s23, 0
      %p158 = por %p156, %p157
      %s159 = ssub.s32 %s26, %s42
      %p160 = scmp.eq.s32.totalorder %s159, 0
      %s162 = sadd.s32 %s161, 1
      %s163 = scalar_select %p160, %s161, %s162
      %p166 = pneg %p160
      %p167 = scmp.eq.s32.totalorder %s17, 7
      %p168 = por %p166, %p167
      %p169 = scmp.ne.s32.totalorder %s161, %s164
      %p170 = scmp.eq.s32.totalorder %s17, 0
      %p171 = por %p169, %p170
      %p172 = scmp.ne.s32.totalorder %s161, %s164
      %p173 = scmp.eq.s32.totalorder %s22, 7
      %p174 = por %p172, %p173
      %p175 = scmp.ne.s32.totalorder %s164, %s165
      %p176 = scmp.eq.s32.totalorder %s22, 0
      %p177 = por %p175, %p176
      %p178 = scmp.ne.s32.totalorder %s164, %s165
      %p179 = scmp.eq.s32.totalorder %s23, 7
      %p180 = por %p178, %p179
      %p182 = scmp.ne.s32.totalorder %s165, %s181
      %p183 = scmp.eq.s32.totalorder %s23, 0
      %p184 = por %p182, %p183
      %s185 = ssub.s32 %s26, %s42
      %p186 = scmp.eq.s32.totalorder %s185, 0
      %s188 = sadd.s32 %s187, 1
      %s189 = scalar_select %p186, %s187, %s188
      %p192 = pneg %p186
      %p193 = scmp.eq.s32.totalorder %s17, 7
      %p194 = por %p192, %p193
      %p195 = scmp.ne.s32.totalorder %s187, %s190
      %p196 = scmp.eq.s32.totalorder %s17, 0
      %p197 = por %p195, %p196
      %p198 = scmp.ne.s32.totalorder %s187, %s190
      %p199 = scmp.eq.s32.totalorder %s22, 7
      %p200 = por %p198, %p199
      %p201 = scmp.ne.s32.totalorder %s190, %s191
      %p202 = scmp.eq.s32.totalorder %s22, 0
      %p203 = por %p201, %p202
      %p204 = scmp.ne.s32.totalorder %s190, %s191
      %p205 = scmp.eq.s32.totalorder %s23, 7
      %p206 = por %p204, %p205
      %p208 = scmp.ne.s32.totalorder %s191, %s207
      %p209 = scmp.eq.s32.totalorder %s23, 0
      %p210 = por %p208, %p209
      %s211 = ssub.s32 %s26, %s42
      %p212 = scmp.eq.s32.totalorder %s211, 0
      %s214 = sadd.s32 %s213, 1
      %s215 = scalar_select %p212, %s213, %s214
      %p218 = pneg %p212
      %p219 = scmp.eq.s32.totalorder %s17, 7
      %p220 = por %p218, %p219
      %p221 = scmp.ne.s32.totalorder %s213, %s216
      %p222 = scmp.eq.s32.totalorder %s17, 0
      %p223 = por %p221, %p222
      %p224 = scmp.ne.s32.totalorder %s213, %s216
      %p225 = scmp.eq.s32.totalorder %s22, 7
      %p226 = por %p224, %p225
      %p227 = scmp.ne.s32.totalorder %s216, %s217
      %p228 = scmp.eq.s32.totalorder %s22, 0
      %p229 = por %p227, %p228
      %p230 = scmp.ne.s32.totalorder %s216, %s217
      %p231 = scmp.eq.s32.totalorder %s23, 7
      %p232 = por %p230, %p231
      %p234 = scmp.ne.s32.totalorder %s217, %s233
      %p235 = scmp.eq.s32.totalorder %s23, 0
      %p236 = por %p234, %p235
      %s238 = sadd.s32 %s237, 1
      %p241 = scmp.eq.s32.totalorder %s17, 7
      %p242 = scmp.ne.s32.totalorder %s237, %s239
      %p243 = scmp.eq.s32.totalorder %s17, 0
      %p244 = por %p242, %p243
      %p245 = scmp.ne.s32.totalorder %s237, %s239
      %p246 = scmp.eq.s32.totalorder %s22, 7
      %p247 = por %p245, %p246
      %p248 = scmp.ne.s32.totalorder %s239, %s240
      %p249 = scmp.eq.s32.totalorder %s22, 0
      %p250 = por %p248, %p249
      %p251 = scmp.ne.s32.totalorder %s239, %s240
      %p252 = scmp.eq.s32.totalorder %s23, 7
      %p253 = por %p251, %p252
      %p255 = scmp.ne.s32.totalorder %s240, %s254
      %p256 = scmp.eq.s32.totalorder %s23, 0
      %p257 = por %p255, %p256
      %s258 = ssub.s32 %s24, %s50
      %s259 = ssub.s32 %s25, %s46
      %s260 = sor.u32 %s258, %s259
      %p261 = scmp.eq.s32.totalorder %s260, 0
      %s263 = sadd.s32 %s262, 1
      %s264 = scalar_select %p261, %s262, %s263
      %p267 = pneg %p261
      %p268 = scmp.eq.s32.totalorder %s17, 7
      %p269 = por %p267, %p268
      %p270 = scmp.ne.s32.totalorder %s262, %s265
      %p271 = scmp.eq.s32.totalorder %s17, 0
      %p272 = por %p270, %p271
      %p273 = scmp.ne.s32.totalorder %s262, %s265
      %p274 = scmp.eq.s32.totalorder %s22, 7
      %p275 = por %p273, %p274
      %p276 = scmp.ne.s32.totalorder %s265, %s266
      %p277 = scmp.eq.s32.totalorder %s22, 0
      %p278 = por %p276, %p277
      %p279 = scmp.ne.s32.totalorder %s265, %s266
      %p280 = scmp.eq.s32.totalorder %s23, 7
      %p281 = por %p279, %p280
      %p283 = scmp.ne.s32.totalorder %s266, %s282
      %p284 = scmp.eq.s32.totalorder %s23, 0
      %p285 = por %p283, %p284
      %p286 = scmp.le.s32.totalorder 1, %s17
      %p287 = scmp.lt.s32.totalorder %s17, 9
      %p288 = pnand %p286, %p287
      %p289 = pneg %p288
      // Predicated region
      $region9: #{tpu_custom_call.1} parent=5 // pred_check
        _
      $region10: #{tpu_custom_call.1} parent=5 // pred_check_branch
        %291 = sbr.rel (%p288) target = $region12
      $region11: #{tpu_custom_call.1} parent=5 // pred_region
        %s292 = ssub.s32 %s17, 1
        // Predicated region
        $region13: #{tpu_custom_call.1} parent=11 // pred_check
          %p293 = pneg %p125
        $region14: #{tpu_custom_call.1} parent=11 // pred_check_branch
          %295 = sbr.rel (%p293) target = $region16
        $region15: #{tpu_custom_call.1} parent=11 // pred_region
          %p296 = scmp.lt.s32.totalorder %s30, 3
          %s297 = scalar_select %p296, %s30, 3
          %s298 = smul.addr %s297, 4
          %s299 = smul.addr %s298, 8
          %s300 = scalar_lea.vmem %s2, %s299
        $region16: #{tpu_custom_call.1} parent=11 // pred_fallthru
          _
        // Predicated region
        $region17: #{tpu_custom_call.1} parent=11 // pred_check
          %p301 = pneg %p151
        $region18: #{tpu_custom_call.1} parent=11 // pred_check_branch
          %303 = sbr.rel (%p301) target = $region20
        $region19: #{tpu_custom_call.1} parent=11 // pred_region
          %p304 = scmp.lt.s32.totalorder %s30, 3
          %s305 = scalar_select %p304, %s30, 3
          %s306 = scalar_lea.vmem %s3, %s305
        $region20: #{tpu_custom_call.1} parent=11 // pred_fallthru
          _
        // Predicated region
        $region21: #{tpu_custom_call.1} parent=11 // pred_check
          %p307 = pneg %p177
        $region22: #{tpu_custom_call.1} parent=11 // pred_check_branch
          %309 = sbr.rel (%p307) target = $region24
        $region23: #{tpu_custom_call.1} parent=11 // pred_region
          %p310 = scmp.lt.s32.totalorder %s30, 3
          %s311 = scalar_select %p310, %s30, 3
          %s312 = smul.addr %s311, 4
          %s313 = smul.addr %s312, 8
          %s314 = scalar_lea.vmem %s4, %s313
        $region24: #{tpu_custom_call.1} parent=11 // pred_fallthru
          _
        // Predicated region
        $region25: #{tpu_custom_call.1} parent=11 // pred_check
          %p315 = pneg %p203
        $region26: #{tpu_custom_call.1} parent=11 // pred_check_branch
          %317 = sbr.rel (%p315) target = $region28
        $region27: #{tpu_custom_call.1} parent=11 // pred_region
          %p318 = scmp.lt.s32.totalorder %s30, 3
          %s319 = scalar_select %p318, %s30, 3
          %s320 = scalar_lea.vmem %s5, %s319
        $region28: #{tpu_custom_call.1} parent=11 // pred_fallthru
          _
        // Predicated region
        $region29: #{tpu_custom_call.1} parent=11 // pred_check
          %p321 = pneg %p229
        $region30: #{tpu_custom_call.1} parent=11 // pred_check_branch
          %323 = sbr.rel (%p321) target = $region32
        $region31: #{tpu_custom_call.1} parent=11 // pred_region
          %p324 = scmp.lt.s32.totalorder %s30, 3
          %s325 = scalar_select %p324, %s30, 3
          %s326 = smul.addr %s325, 8
          %s327 = scalar_lea.vmem %s6, %s326
        $region32: #{tpu_custom_call.1} parent=11 // pred_fallthru
          _
        // Predicated region
        $region33: #{tpu_custom_call.1} parent=11 // pred_check
          %p328 = pneg %p250
        $region34: #{tpu_custom_call.1} parent=11 // pred_check_branch
          %330 = sbr.rel (%p328) target = $region36
        $region35: #{tpu_custom_call.1} parent=11 // pred_region
          _
        $region36: #{tpu_custom_call.1} parent=11 // pred_fallthru
          _
      $region12: #{tpu_custom_call.1} parent=5 // pred_fallthru
        _
      %p331 = scmp.lt.s32.totalorder %s17, 8
      // Predicated region
      $region37: #{tpu_custom_call.1} parent=5 // pred_check
        %p332 = pneg %p331
      $region38: #{tpu_custom_call.1} parent=5 // pred_check_branch
        %334 = sbr.rel (%p332) target = $region40
      $region39: #{tpu_custom_call.1} parent=5 // pred_region
        // Predicated region
        $region41: #{tpu_custom_call.1} parent=39 // pred_check
          %p335 = pneg %p65
        $region42: #{tpu_custom_call.1} parent=39 // pred_check_branch
          %337 = sbr.rel (%p335) target = $region44
        $region43: #{tpu_custom_call.1} parent=39 // pred_region
          %p338 = scmp.lt.s32.totalorder %s24, 1
          %s339 = scalar_select %p338, %s24, 1
          %p340 = scmp.lt.s32.totalorder %s25, 0
          %s341 = scalar_select %p340, %s25, 0
          %s342 = sadd.s32 %s341, %s339
          %s343 = smul.addr %s342, 8
          %s344 = scalar_lea.vmem %s0, %s343
        $region44: #{tpu_custom_call.1} parent=39 // pred_fallthru
          _
        // Predicated region
        $region45: #{tpu_custom_call.1} parent=39 // pred_check
          %p345 = pneg %p93
        $region46: #{tpu_custom_call.1} parent=39 // pred_check_branch
          %347 = sbr.rel (%p345) target = $region48
        $region47: #{tpu_custom_call.1} parent=39 // pred_region
          %p348 = scmp.lt.s32.totalorder %s24, 1
          %s349 = scalar_select %p348, %s24, 1
          %p350 = scmp.lt.s32.totalorder %s27, 0
          %s351 = scalar_select %p350, %s27, 0
          %s352 = sadd.s32 %s351, %s349
          %s353 = smul.addr %s352, 8
          %s354 = scalar_lea.vmem %s1, %s353
        $region48: #{tpu_custom_call.1} parent=39 // pred_fallthru
          _
      $region40: #{tpu_custom_call.1} parent=5 // pred_fallthru
        _
      %p355 = scmp.le.s32.totalorder 1, %s17
      %p356 = scmp.lt.s32.totalorder %s17, 9
      %p357 = pnand %p355, %p356
      %p358 = pneg %p357
      // Predicated region
      $region49: #{tpu_custom_call.1} parent=5 // pred_check
        _
      $region50: #{tpu_custom_call.1} parent=5 // pred_check_branch
        %360 = sbr.rel (%p357) target = $region52
      $region51: #{tpu_custom_call.1} parent=5 // pred_region
        %s361 = ssub.s32 %s17, 1
        %p362 = scmp.lt.s32.totalorder %s28, 1
        %s363 = scalar_select %p362, %s28, 1
        %p364 = scmp.lt.s32.totalorder %s29, 0
        %s365 = scalar_select %p364, %s29, 0
        %s366 = sadd.s32 %s365, %s363
        %s367 = smul.addr %s366, 8
        %s368 = scalar_lea.vmem %s0, %s367
        %p369 = pneg %p71
        %p370 = pneg %p68
        %p371 = scmp.lt.s32.totalorder %s28, 1
        %s372 = scalar_select %p371, %s28, 1
        %p373 = scmp.lt.s32.totalorder %s31, 0
        %s374 = scalar_select %p373, %s31, 0
        %s375 = sadd.s32 %s374, %s372
        %s376 = smul.addr %s375, 8
        %s377 = scalar_lea.vmem %s1, %s376
        %p378 = pneg %p99
        %p379 = pneg %p96
        %p380 = scmp.lt.s32.totalorder %s30, 3
        %s381 = scalar_select %p380, %s30, 3
        %s382 = smul.addr %s381, 4
        %s383 = smul.addr %s382, 8
        %s384 = scalar_lea.vmem %s2, %s383
        %p385 = pneg %p125
        %p386 = pneg %p122
        %p387 = scmp.lt.s32.totalorder %s30, 3
        %s388 = scalar_select %p387, %s30, 3
        %s389 = scalar_lea.vmem %s3, %s388
        %p390 = pneg %p151
        %p391 = pneg %p148
        %p392 = scmp.lt.s32.totalorder %s30, 3
        %s393 = scalar_select %p392, %s30, 3
        %s394 = smul.addr %s393, 4
        %s395 = smul.addr %s394, 8
        %s396 = scalar_lea.vmem %s4, %s395
        %p397 = pneg %p177
        %p398 = pneg %p174
        %p399 = scmp.lt.s32.totalorder %s30, 3
        %s400 = scalar_select %p399, %s30, 3
        %s401 = scalar_lea.vmem %s5, %s400
        %p402 = pneg %p203
        %p403 = pneg %p200
        %p404 = scmp.lt.s32.totalorder %s30, 3
        %s405 = scalar_select %p404, %s30, 3
        %s406 = smul.addr %s405, 8
        %s407 = scalar_lea.vmem %s6, %s406
        %p408 = pneg %p229
        %p409 = pneg %p226
        %p410 = pneg %p250
        %p411 = pneg %p247
        %p412 = pneg %p278
        %p413 = pneg %p275
        %s414 = sand.u32 %s265, 1
        %s415 = scalar_lea.sflag [#allocation8], %s414
        %s416 = sand.u32 %s265, 1
        %s417 = smul.addr %s416, 8
        %s418 = scalar_lea.vmem [#allocation7], %s417
        %p419 = scmp.lt.s32.totalorder %s28, 1
        %s420 = scalar_select %p419, %s28, 1
        %p421 = scmp.lt.s32.totalorder %s29, 0
        %s422 = scalar_select %p421, %s29, 0
        %s423 = sadd.s32 %s422, %s420
        %s424 = smul.addr %s423, 8
        %s425 = scalar_lea.vmem %s0, %s424
        %p426 = scmp.lt.s32.totalorder %s28, 1
        %s427 = scalar_select %p426, %s28, 1
        %p428 = scmp.lt.s32.totalorder %s31, 0
        %s429 = scalar_select %p428, %s31, 0
        %s430 = sadd.s32 %s429, %s427
        %s431 = smul.addr %s430, 8
        %s432 = scalar_lea.vmem %s1, %s431
        %p433 = scmp.lt.s32.totalorder %s30, 3
        %s434 = scalar_select %p433, %s30, 3
        %s435 = smul.addr %s434, 4
        %s436 = smul.addr %s435, 8
        %s437 = scalar_lea.vmem %s2, %s436
        %p438 = scmp.lt.s32.totalorder %s30, 3
        %s439 = scalar_select %p438, %s30, 3
        %s440 = scalar_lea.vmem %s3, %s439
        %p441 = scmp.lt.s32.totalorder %s30, 3
        %s442 = scalar_select %p441, %s30, 3
        %s443 = smul.addr %s442, 4
        %s444 = smul.addr %s443, 8
        %s445 = scalar_lea.vmem %s4, %s444
        %p446 = scmp.lt.s32.totalorder %s30, 3
        %s447 = scalar_select %p446, %s30, 3
        %s448 = scalar_lea.vmem %s5, %s447
        %p449 = scmp.lt.s32.totalorder %s30, 3
        %s450 = scalar_select %p449, %s30, 3
        %s451 = smul.addr %s450, 8
        %s452 = scalar_lea.vmem %s6, %s451
        %p453 = scmp.eq.s32.totalorder %s30, 0
        %p454 = scmp.eq.s32.totalorder %s31, 0
        %p455 = pnand %p453, %p454
        %p456 = pneg %p455
        // Predicated region
        $region53: #{tpu_custom_call.1} parent=51 // pred_check
          _
        $region54: #{tpu_custom_call.1} parent=51 // pred_check_branch
          %458 = sbr.rel (%p455) target = $region56
        $region55: #{tpu_custom_call.1} parent=51 // pred_region
          %vm459 = vcmask 261120
          %460 = vst.msk [vmem:[#allocation6] sm:$0xff] %vm459, 0.0
        $region56: #{tpu_custom_call.1} parent=51 // pred_fallthru
          _
        // Predicated region
        $region57: #{tpu_custom_call.1} parent=51 // pred_check
          %p461 = pneg %p454
        $region58: #{tpu_custom_call.1} parent=51 // pred_check_branch
          %463 = sbr.rel (%p461) target = $region60
        $region59: #{tpu_custom_call.1} parent=51 // pred_region
          %v464 = vld [vmem:[%s425] sm:$0xff]
          %v465 = vld [vmem:[%s437] sm:$0xff]
          %v466 = vld [vmem:[%s437 + $0x8] sm:$0xff]
          %v467 = vld [vmem:[%s437 + $0x10] sm:$0xff]
          %v468 = vld [vmem:[%s437 + $0x18] sm:$0xff]
          %v469 = vld [vmem:[%s440] sm:$0x1]
          %v471 = vlaneseq
          %v472 = vshrl.u32 %v471, 7
          %v473 = vsub.s32 0, %v472
          %v474 = vrot.slane %v469, %v473
          %vm476 = vcmask 261120
          %v478 = vsel %vm476, %v464, 0
          %480 = vmatprep.subr.mxu0 0.0
          %481 = vmatpush1.msra.mxu0 0.0
          %482 = vmatprep.subr.mxu0 0.0
          %483 = vmatpush1.msra.mxu0 0.0
          %484 = vmatprep.subr.mxu0 0.0
          %485 = vmatpush1.msra.mxu0 0.0
          %486 = vmatprep.subr.mxu0 0.0
          %487 = vmatpush1.msra.mxu0 0.0
          %488 = vmatprep.subr.mxu0 0.0
          %489 = vmatpush1.msra.mxu0 0.0
          %490 = vmatprep.subr.mxu0 0.0
          %491 = vmatpush1.msra.mxu0 0.0
          %492 = vmatprep.subr.mxu0 0.0
          %493 = vmatpush1.msra.mxu0 0.0
          %494 = vmatprep.subr.mxu0 0.0
          %495 = vmatpush1.msra.mxu0 0.0
          %496 = vmatprep.subr.mxu0 0.0
          %497 = vmatpush1.msra.mxu0 0.0
          %498 = vmatprep.subr.mxu0 0.0
          %499 = vmatpush1.msra.mxu0 0.0
          %500 = vmatprep.subr.mxu0 0.0
          %501 = vmatpush1.msra.mxu0 0.0
          %502 = vmatprep.subr.mxu0 0.0
          %503 = vmatpush1.msra.mxu0 0.0
          %504 = vmatprep.subr.mxu0 0.0
          %505 = vmatpush1.msra.mxu0 %v468
          %506 = vmatprep.subr.mxu0 0.0
          %507 = vmatpush1.msra.mxu0 %v467
          %508 = vmatprep.subr.mxu0 0.0
          %509 = vmatpush1.msra.mxu0 %v466
          %510 = vmatprep.subr.mxu0 0.0
          %511 = vmatpush1.msra.mxu0 %v465
          %512 = vmatprep.subr.mxu0 0.0
          %513 = vmatpush2.msra.mxu0 0.0
          %514 = vmatprep.subr.mxu0 0.0
          %515 = vmatpush2.msra.mxu0 0.0
          %516 = vmatprep.subr.mxu0 0.0
          %517 = vmatpush2.msra.mxu0 0.0
          %518 = vmatprep.subr.mxu0 0.0
          %519 = vmatpush2.msra.mxu0 0.0
          %520 = vmatprep.subr.mxu0 0.0
          %521 = vmatpush2.msra.mxu0 0.0
          %522 = vmatprep.subr.mxu0 0.0
          %523 = vmatpush2.msra.mxu0 0.0
          %524 = vmatprep.subr.mxu0 0.0
          %525 = vmatpush2.msra.mxu0 0.0
          %526 = vmatprep.subr.mxu0 0.0
          %527 = vmatpush2.msra.mxu0 0.0
          %528 = vmatprep.subr.mxu0 0.0
          %529 = vmatpush2.msra.mxu0 0.0
          %530 = vmatprep.subr.mxu0 0.0
          %531 = vmatpush2.msra.mxu0 0.0
          %532 = vmatprep.subr.mxu0 0.0
          %533 = vmatpush2.msra.mxu0 0.0
          %534 = vmatprep.subr.mxu0 0.0
          %535 = vmatpush2.msra.mxu0 0.0
          %536 = vmatprep.subr.mxu0 0.0
          %537 = vmatpush2.msra.mxu0 0.0
          %538 = vmatprep.subr.mxu0 0.0
          %539 = vmatpush2.msra.mxu0 0.0
          %540 = vmatprep.subr.mxu0 0.0
          %541 = vmatpush2.msra.mxu0 0.0
          %542 = vmatprep.subr.mxu0 0.0
          %543 = vmatpush2.msra.mxu0 0.0
          %544 = vmatprep.mubr.f32.mxu0 0.0
          %545 = vmatmul.mubr.f32.gmra.mxu0 %v478
          %v546 = vpop.f32.mrf.mxu0
          %v547 = vadd.f32 %v474, %v546
          %v548 = vpop.f32.mrf.mxu0
          %549 = vdwg.mxu0
          %v550 = vmul.f32 %v547, 0.35355338
          %vm551 = vcmask 64512
          %552 = vst.msk [vmem:[#allocation2] sm:$0xff] %vm551, %v550
          %vm553 = vcmask 7168
          %554 = vst.msk [vmem:[#allocation3] sm:$0xff] %vm553, -inf
          %555 = vst.msk [vmem:[#allocation4] sm:$0xff] %vm553, 0.0
          %556 = vst.msk [vmem:[#allocation5] sm:$0xff] %vm551, 0.0
        $region60: #{tpu_custom_call.1} parent=51 // pred_fallthru
          _
        %v557 = vld [vmem:[%s432] sm:$0xff]
        %v558 = vld [vmem:[%s445] sm:$0xff]
        %v559 = vld [vmem:[%s445 + $0x8] sm:$0xff]
        %v560 = vld [vmem:[%s445 + $0x10] sm:$0xff]
        %v561 = vld [vmem:[%s445 + $0x18] sm:$0xff]
        %v562 = vld [vmem:[%s448] sm:$0x1]
        %v564 = vlaneseq
        %v565 = vshrl.u32 %v564, 7
        %v566 = vsub.s32 0, %v565
        %v567 = vrot.slane %v562, %v566
        %vm569 = vcmask 261120
        %v571 = vsel %vm569, %v557, 0
        %573 = vmatprep.subr.mxu0 0.0
        %574 = vmatpush1.msra.mxu0 0.0
        %575 = vmatprep.subr.mxu0 0.0
        %576 = vmatpush1.msra.mxu0 0.0
        %577 = vmatprep.subr.mxu0 0.0
        %578 = vmatpush1.msra.mxu0 0.0
        %579 = vmatprep.subr.mxu0 0.0
        %580 = vmatpush1.msra.mxu0 0.0
        %581 = vmatprep.subr.mxu0 0.0
        %582 = vmatpush1.msra.mxu0 0.0
        %583 = vmatprep.subr.mxu0 0.0
        %584 = vmatpush1.msra.mxu0 0.0
        %585 = vmatprep.subr.mxu0 0.0
        %586 = vmatpush1.msra.mxu0 0.0
        %587 = vmatprep.subr.mxu0 0.0
        %588 = vmatpush1.msra.mxu0 0.0
        %589 = vmatprep.subr.mxu0 0.0
        %590 = vmatpush1.msra.mxu0 0.0
        %591 = vmatprep.subr.mxu0 0.0
        %592 = vmatpush1.msra.mxu0 0.0
        %593 = vmatprep.subr.mxu0 0.0
        %594 = vmatpush1.msra.mxu0 0.0
        %595 = vmatprep.subr.mxu0 0.0
        %596 = vmatpush1.msra.mxu0 0.0
        %597 = vmatprep.subr.mxu0 0.0
        %598 = vmatpush1.msra.mxu0 %v561
        %599 = vmatprep.subr.mxu0 0.0
        %600 = vmatpush1.msra.mxu0 %v560
        %601 = vmatprep.subr.mxu0 0.0
        %602 = vmatpush1.msra.mxu0 %v559
        %603 = vmatprep.subr.mxu0 0.0
        %604 = vmatpush1.msra.mxu0 %v558
        %605 = vmatprep.subr.mxu0 0.0
        %606 = vmatpush2.msra.mxu0 0.0
        %607 = vmatprep.subr.mxu0 0.0
        %608 = vmatpush2.msra.mxu0 0.0
        %609 = vmatprep.subr.mxu0 0.0
        %610 = vmatpush2.msra.mxu0 0.0
        %611 = vmatprep.subr.mxu0 0.0
        %612 = vmatpush2.msra.mxu0 0.0
        %613 = vmatprep.subr.mxu0 0.0
        %614 = vmatpush2.msra.mxu0 0.0
        %615 = vmatprep.subr.mxu0 0.0
        %616 = vmatpush2.msra.mxu0 0.0
        %617 = vmatprep.subr.mxu0 0.0
        %618 = vmatpush2.msra.mxu0 0.0
        %619 = vmatprep.subr.mxu0 0.0
        %620 = vmatpush2.msra.mxu0 0.0
        %621 = vmatprep.subr.mxu0 0.0
        %622 = vmatpush2.msra.mxu0 0.0
        %623 = vmatprep.subr.mxu0 0.0
        %624 = vmatpush2.msra.mxu0 0.0
        %625 = vmatprep.subr.mxu0 0.0
        %626 = vmatpush2.msra.mxu0 0.0
        %627 = vmatprep.subr.mxu0 0.0
        %628 = vmatpush2.msra.mxu0 0.0
        %629 = vmatprep.subr.mxu0 0.0
        %630 = vmatpush2.msra.mxu0 0.0
        %631 = vmatprep.subr.mxu0 0.0
        %632 = vmatpush2.msra.mxu0 0.0
        %633 = vmatprep.subr.mxu0 0.0
        %634 = vmatpush2.msra.mxu0 0.0
        %635 = vmatprep.subr.mxu0 0.0
        %636 = vmatpush2.msra.mxu0 0.0
        %637 = vmatprep.mubr.f32.mxu0 0.0
        %638 = vmatmul.mubr.f32.gmra.mxu0 %v571
        %v639 = vpop.f32.mrf.mxu0
        %v640 = vadd.f32 %v567, %v639
        %v641 = vpop.f32.mrf.mxu0
        %642 = vdwg.mxu0
        %v643 = vld [vmem:[#allocation2] sm:$0xff]
        %vm644 = vcmask 64512
        %v646 = vsel %vm644, %v643, 0
        %v649 = vsel %vm644, %v640, 0
        %651 = vmatprep.subr.mxu0 0.0
        %652 = vmatpush1.xpose.msra.mxu0 0.0
        %653 = vmatprep.subr.mxu0 0.0
        %654 = vmatpush1.xpose.msra.mxu0 0.0
        %655 = vmatprep.subr.mxu0 0.0
        %656 = vmatpush1.xpose.msra.mxu0 0.0
        %657 = vmatprep.subr.mxu0 0.0
        %658 = vmatpush1.xpose.msra.mxu0 0.0
        %659 = vmatprep.subr.mxu0 0.0
        %660 = vmatpush1.xpose.msra.mxu0 0.0
        %661 = vmatprep.subr.mxu0 0.0
        %662 = vmatpush1.xpose.msra.mxu0 0.0
        %663 = vmatprep.subr.mxu0 0.0
        %664 = vmatpush1.xpose.msra.mxu0 0.0
        %665 = vmatprep.subr.mxu0 0.0
        %666 = vmatpush1.xpose.msra.mxu0 0.0
        %667 = vmatprep.subr.mxu0 0.0
        %668 = vmatpush1.xpose.msra.mxu0 0.0
        %669 = vmatprep.subr.mxu0 0.0
        %670 = vmatpush1.xpose.msra.mxu0 0.0
        %671 = vmatprep.subr.mxu0 0.0
        %672 = vmatpush1.xpose.msra.mxu0 0.0
        %673 = vmatprep.subr.mxu0 0.0
        %674 = vmatpush1.xpose.msra.mxu0 0.0
        %675 = vmatprep.subr.mxu0 0.0
        %676 = vmatpush1.xpose.msra.mxu0 0.0
        %677 = vmatprep.subr.mxu0 0.0
        %678 = vmatpush1.xpose.msra.mxu0 0.0
        %679 = vmatprep.subr.mxu0 0.0
        %680 = vmatpush1.xpose.msra.mxu0 0.0
        %681 = vmatprep.subr.mxu0 0.0
        %682 = vmatpush1.xpose.msra.mxu0 %v649
        %683 = vmatprep.subr.mxu0 0.0
        %684 = vmatpush2.xpose.msra.mxu0 0.0
        %685 = vmatprep.subr.mxu0 0.0
        %686 = vmatpush2.xpose.msra.mxu0 0.0
        %687 = vmatprep.subr.mxu0 0.0
        %688 = vmatpush2.xpose.msra.mxu0 0.0
        %689 = vmatprep.subr.mxu0 0.0
        %690 = vmatpush2.xpose.msra.mxu0 0.0
        %691 = vmatprep.subr.mxu0 0.0
        %692 = vmatpush2.xpose.msra.mxu0 0.0
        %693 = vmatprep.subr.mxu0 0.0
        %694 = vmatpush2.xpose.msra.mxu0 0.0
        %695 = vmatprep.subr.mxu0 0.0
        %696 = vmatpush2.xpose.msra.mxu0 0.0
        %697 = vmatprep.subr.mxu0 0.0
        %698 = vmatpush2.xpose.msra.mxu0 0.0
        %699 = vmatprep.subr.mxu0 0.0
        %700 = vmatpush2.xpose.msra.mxu0 0.0
        %701 = vmatprep.subr.mxu0 0.0
        %702 = vmatpush2.xpose.msra.mxu0 0.0
        %703 = vmatprep.subr.mxu0 0.0
        %704 = vmatpush2.xpose.msra.mxu0 0.0
        %705 = vmatprep.subr.mxu0 0.0
        %706 = vmatpush2.xpose.msra.mxu0 0.0
        %707 = vmatprep.subr.mxu0 0.0
        %708 = vmatpush2.xpose.msra.mxu0 0.0
        %709 = vmatprep.subr.mxu0 0.0
        %710 = vmatpush2.xpose.msra.mxu0 0.0
        %711 = vmatprep.subr.mxu0 0.0
        %712 = vmatpush2.xpose.msra.mxu0 0.0
        %713 = vmatprep.subr.mxu0 0.0
        %714 = vmatpush2.xpose.msra.mxu0 0.0
        %715 = vmatprep.mubr.f32.mxu0 0.0
        %716 = vmatmul.mubr.f32.gmra.mxu0 %v646
        %v717 = vpop.f32.mrf.mxu0
        %v718 = vadd.f32 0.0, %v717
        %v719 = vpop.f32.mrf.mxu0
        %720 = vdwg.mxu0
        %v721 = vld [vmem:[#allocation3] sm:$0xff]
        %v722 = vsel %vm644, %v718, -inf
        %723 = vmax.xlane.f32.xlu0 %v722
        %v724 = vpop.xlane.xlu0 %723
        %v725 = vmax.f32 %v721, %v724
        %v726 = vsub.f32 %v721, %v725
        %v727 = vmul.f32 %v726, 1.442695
        %v728 = vpow.pop %v727
        %730 = vset.pattern.permute.xlu0 0
        %731 = vperm.xlu0 %730, %v725
        %v732 = vpop.permute.xlu0 %731
        %v734 = vsub.f32 %v718, %v732
        %v735 = vmul.f32 %v734, 1.442695
        %v736 = vpow.pop %v735
        %v737 = vld [vmem:[#allocation4] sm:$0xff]
        %v738 = vmul.f32 %v728, %v737
        %v739 = vsel %vm644, %v736, 0.0
        %740 = vadd.xlane.f32.xlu0 %v739
        %v741 = vpop.xlane.xlu0 %740
        %v742 = vadd.f32 %v738, %v741
        %vm743 = vcmask 7168
        %744 = vst.msk [vmem:[#allocation4] sm:$0xff] %vm743, %v742
        %v745 = vld [vmem:[#allocation5] sm:$0xff]
        %747 = vset.pattern.permute.xlu0 0
        %748 = vperm.xlu0 %747, %v728
        %v749 = vpop.permute.xlu0 %748
        %v751 = vmul.f32 %v749, %v745
        %752 = vrot.lane.b32.xlu0 %v640, 120
        %v753 = vpop.permute.xlu0 %752
        %v756 = vsel %vm644, %v736, 0
        %758 = vmatprep.subr.mxu0 0.0
        %759 = vmatpush1.msra.mxu0 0.0
        %760 = vmatprep.subr.mxu0 0.0
        %761 = vmatpush1.msra.mxu0 0.0
        %762 = vmatprep.subr.mxu0 0.0
        %763 = vmatpush1.msra.mxu0 0.0
        %764 = vmatprep.subr.mxu0 0.0
        %765 = vmatpush1.msra.mxu0 0.0
        %766 = vmatprep.subr.mxu0 0.0
        %767 = vmatpush1.msra.mxu0 0.0
        %768 = vmatprep.subr.mxu0 0.0
        %769 = vmatpush1.msra.mxu0 0.0
        %770 = vmatprep.subr.mxu0 0.0
        %771 = vmatpush1.msra.mxu0 0.0
        %772 = vmatprep.subr.mxu0 0.0
        %773 = vmatpush1.msra.mxu0 0.0
        %774 = vmatprep.subr.mxu0 0.0
        %775 = vmatpush1.msra.mxu0 0.0
        %776 = vmatprep.subr.mxu0 0.0
        %777 = vmatpush1.msra.mxu0 0.0
        %778 = vmatprep.subr.mxu0 0.0
        %779 = vmatpush1.msra.mxu0 0.0
        %780 = vmatprep.subr.mxu0 0.0
        %781 = vmatpush1.msra.mxu0 0.0
        %782 = vmatprep.subr.mxu0 0.0
        %783 = vmatpush1.msra.mxu0 0.0
        %784 = vmatprep.subr.mxu0 0.0
        %785 = vmatpush1.msra.mxu0 0.0
        %786 = vmatprep.subr.mxu0 0.0
        %787 = vmatpush1.msra.mxu0 0.0
        %788 = vmatprep.subr.mxu0 0.0
        %789 = vmatpush1.msra.mxu0 %v753
        %790 = vmatprep.subr.mxu0 0.0
        %791 = vmatpush2.msra.mxu0 0.0
        %792 = vmatprep.subr.mxu0 0.0
        %793 = vmatpush2.msra.mxu0 0.0
        %794 = vmatprep.subr.mxu0 0.0
        %795 = vmatpush2.msra.mxu0 0.0
        %796 = vmatprep.subr.mxu0 0.0
        %797 = vmatpush2.msra.mxu0 0.0
        %798 = vmatprep.subr.mxu0 0.0
        %799 = vmatpush2.msra.mxu0 0.0
        %800 = vmatprep.subr.mxu0 0.0
        %801 = vmatpush2.msra.mxu0 0.0
        %802 = vmatprep.subr.mxu0 0.0
        %803 = vmatpush2.msra.mxu0 0.0
        %804 = vmatprep.subr.mxu0 0.0
        %805 = vmatpush2.msra.mxu0 0.0
        %806 = vmatprep.subr.mxu0 0.0
        %807 = vmatpush2.msra.mxu0 0.0
        %808 = vmatprep.subr.mxu0 0.0
        %809 = vmatpush2.msra.mxu0 0.0
        %810 = vmatprep.subr.mxu0 0.0
        %811 = vmatpush2.msra.mxu0 0.0
        %812 = vmatprep.subr.mxu0 0.0
        %813 = vmatpush2.msra.mxu0 0.0
        %814 = vmatprep.subr.mxu0 0.0
        %815 = vmatpush2.msra.mxu0 0.0
        %816 = vmatprep.subr.mxu0 0.0
        %817 = vmatpush2.msra.mxu0 0.0
        %818 = vmatprep.subr.mxu0 0.0
        %819 = vmatpush2.msra.mxu0 0.0
        %820 = vmatprep.subr.mxu0 0.0
        %821 = vmatpush2.msra.mxu0 0.0
        %822 = vmatprep.mubr.f32.mxu0 0.0
        %823 = vmatmul.mubr.f32.gmra.mxu0 %v756
        %v824 = vpop.f32.mrf.mxu0
        %v825 = vadd.f32 0.0, %v824
        %v826 = vpop.f32.mrf.mxu0
        %827 = vdwg.mxu0
        %v828 = vadd.f32 %v751, %v825
        %829 = vst.msk [vmem:[#allocation5] sm:$0xff] %vm644, %v828
        %830 = vst.msk [vmem:[#allocation3] sm:$0xff] %vm743, %v725
        // Predicated region
        $region61: #{tpu_custom_call.1} parent=51 // pred_check
          %p831 = pneg %p454
        $region62: #{tpu_custom_call.1} parent=51 // pred_check_branch
          %833 = sbr.rel (%p831) target = $region64
        $region63: #{tpu_custom_call.1} parent=51 // pred_region
          %v834 = vld [vmem:[#allocation5] sm:$0xff]
          %v835 = vld [vmem:[#allocation4] sm:$0xff]
          %v836 = vrcp.pop %v835
          %838 = vset.pattern.permute.xlu0 0
          %839 = vperm.xlu0 %838, %v836
          %v840 = vpop.permute.xlu0 %839
          %v842 = vmul.f32 %v834, %v840
          %v843 = vld [vmem:[#allocation6] sm:$0xff]
          %v844 = vld [vmem:[%s452] sm:$0xff]
          %v846 = vsel %vm644, %v842, 0
          %848 = vmatprep.subr.mxu0 0.0
          %849 = vmatpush1.msra.mxu0 0.0
          %850 = vmatprep.subr.mxu0 0.0
          %851 = vmatpush1.msra.mxu0 0.0
          %852 = vmatprep.subr.mxu0 0.0
          %853 = vmatpush1.msra.mxu0 0.0
          %854 = vmatprep.subr.mxu0 0.0
          %855 = vmatpush1.msra.mxu0 0.0
          %856 = vmatprep.subr.mxu0 0.0
          %857 = vmatpush1.msra.mxu0 0.0
          %858 = vmatprep.subr.mxu0 0.0
          %859 = vmatpush1.msra.mxu0 0.0
          %860 = vmatprep.subr.mxu0 0.0
          %861 = vmatpush1.msra.mxu0 0.0
          %862 = vmatprep.subr.mxu0 0.0
          %863 = vmatpush1.msra.mxu0 0.0
          %864 = vmatprep.subr.mxu0 0.0
          %865 = vmatpush1.msra.mxu0 0.0
          %866 = vmatprep.subr.mxu0 0.0
          %867 = vmatpush1.msra.mxu0 0.0
          %868 = vmatprep.subr.mxu0 0.0
          %869 = vmatpush1.msra.mxu0 0.0
          %870 = vmatprep.subr.mxu0 0.0
          %871 = vmatpush1.msra.mxu0 0.0
          %872 = vmatprep.subr.mxu0 0.0
          %873 = vmatpush1.msra.mxu0 0.0
          %874 = vmatprep.subr.mxu0 0.0
          %875 = vmatpush1.msra.mxu0 0.0
          %876 = vmatprep.subr.mxu0 0.0
          %877 = vmatpush1.msra.mxu0 0.0
          %878 = vmatprep.subr.mxu0 0.0
          %879 = vmatpush1.msra.mxu0 %v844
          %880 = vmatprep.subr.mxu0 0.0
          %881 = vmatpush2.msra.mxu0 0.0
          %882 = vmatprep.subr.mxu0 0.0
          %883 = vmatpush2.msra.mxu0 0.0
          %884 = vmatprep.subr.mxu0 0.0
          %885 = vmatpush2.msra.mxu0 0.0
          %886 = vmatprep.subr.mxu0 0.0
          %887 = vmatpush2.msra.mxu0 0.0
          %888 = vmatprep.subr.mxu0 0.0
          %889 = vmatpush2.msra.mxu0 0.0
          %890 = vmatprep.subr.mxu0 0.0
          %891 = vmatpush2.msra.mxu0 0.0
          %892 = vmatprep.subr.mxu0 0.0
          %893 = vmatpush2.msra.mxu0 0.0
          %894 = vmatprep.subr.mxu0 0.0
          %895 = vmatpush2.msra.mxu0 0.0
          %896 = vmatprep.subr.mxu0 0.0
          %897 = vmatpush2.msra.mxu0 0.0
          %898 = vmatprep.subr.mxu0 0.0
          %899 = vmatpush2.msra.mxu0 0.0
          %900 = vmatprep.subr.mxu0 0.0
          %901 = vmatpush2.msra.mxu0 0.0
          %902 = vmatprep.subr.mxu0 0.0
          %903 = vmatpush2.msra.mxu0 0.0
          %904 = vmatprep.subr.mxu0 0.0
          %905 = vmatpush2.msra.mxu0 0.0
          %906 = vmatprep.subr.mxu0 0.0
          %907 = vmatpush2.msra.mxu0 0.0
          %908 = vmatprep.subr.mxu0 0.0
          %909 = vmatpush2.msra.mxu0 0.0
          %910 = vmatprep.subr.mxu0 0.0
          %911 = vmatpush2.msra.mxu0 0.0
          %912 = vmatprep.mubr.f32.mxu0 0.0
          %913 = vmatmul.mubr.f32.gmra.mxu0 %v846
          %v914 = vpop.f32.mrf.mxu0
          %v915 = vadd.f32 0.0, %v914
          %v916 = vpop.f32.mrf.mxu0
          %917 = vdwg.mxu0
          %v918 = vadd.f32 %v843, %v915
          %919 = vst.msk [vmem:[#allocation6] sm:$0xff] %vm569, %v918
        $region64: #{tpu_custom_call.1} parent=51 // pred_fallthru
          _
        %p920 = scmp.eq.s32.totalorder %s30, 3
        %p921 = pnand %p920, %p454
        %p922 = pneg %p921
        // Predicated region
        $region65: #{tpu_custom_call.1} parent=51 // pred_check
          _
        $region66: #{tpu_custom_call.1} parent=51 // pred_check_branch
          %924 = sbr.rel (%p921) target = $region68
        $region67: #{tpu_custom_call.1} parent=51 // pred_region
          %v925 = vld [vmem:[#allocation6] sm:$0xff]
          %v926 = vld [vmem:[%s7] sm:$0x1]
          %v928 = vlaneseq
          %v929 = vshrl.u32 %v928, 7
          %v930 = vsub.s32 0, %v929
          %v931 = vrot.slane %v926, %v930
          %v933 = vadd.f32 %v925, %v931
          %934 = vst.msk [vmem:[%s418] sm:$0xff] %vm569, %v933
        $region68: #{tpu_custom_call.1} parent=51 // pred_fallthru
          _
        %s935 = sand.u32 %s265, 1
        %s936 = scalar_lea.sflag [#allocation8], %s935
        %s937 = sand.u32 %s265, 1
        %s938 = smul.addr %s937, 8
        %s939 = scalar_lea.vmem [#allocation7], %s938
        // Predicated region
        $region69: #{tpu_custom_call.1} parent=51 // pred_check
          %p940 = pneg %p275
        $region70: #{tpu_custom_call.1} parent=51 // pred_check_branch
          %942 = sbr.rel (%p940) target = $region72
        $region71: #{tpu_custom_call.1} parent=51 // pred_region
          %s944 = ssub.s32 128, 128
          %945 = vsyncadd %s936, %s944
          %s946 = sadd.s32 %s29, %s28
          %s947 = smul.addr %s946, 128
          %s948 = scalar_lea.hbm %s8, %s947
          %s950 = sshll.u32 %s939, 4
          %s951 = int_to_ptr.vmem [resolvable:$true] %s950
          %953 = dma.vmem_to_hbm [thread:$0]  %s951, 128, %s948, %s936
        $region72: #{tpu_custom_call.1} parent=51 // pred_fallthru
          _
      $region52: #{tpu_custom_call.1} parent=5 // pred_fallthru
        _
      %p954 = scmp.le.s32.totalorder 2, %s17
      // Predicated region
      $region73: #{tpu_custom_call.1} parent=5 // pred_check
        %p955 = pneg %p954
      $region74: #{tpu_custom_call.1} parent=5 // pred_check_branch
        %957 = sbr.rel (%p955) target = $region76
      $region75: #{tpu_custom_call.1} parent=5 // pred_region
        %s958 = ssub.s32 %s17, 2
        // Predicated region
        $region77: #{tpu_custom_call.1} parent=75 // pred_check
          %p959 = pneg %p281
        $region78: #{tpu_custom_call.1} parent=75 // pred_check_branch
          %961 = sbr.rel (%p959) target = $region80
        $region79: #{tpu_custom_call.1} parent=75 // pred_region
          %s962 = sand.u32 %s266, 1
          %s963 = scalar_lea.sflag [#allocation8], %s962
          %s964 = sand.u32 %s266, 1
          %s965 = smul.addr %s964, 8
          %s966 = scalar_lea.vmem [#allocation7], %s965
          %967 = dma.done %s963, 128
        $region80: #{tpu_custom_call.1} parent=75 // pred_fallthru
          _
      $region76: #{tpu_custom_call.1} parent=5 // pred_fallthru
        _
    $region6: #{tpu_custom_call.1} parent=1 // loop_footer
      %s21 = sadd.s32 1, %s17
    $region7: #{tpu_custom_call.1} parent=1 // loop_footer_branch
      %16 = sbr.rel target = $region3
    $region8: #{tpu_custom_call.1} parent=1 // loop_exit
      _
    %968 = vsyncpa [#allocation8], 1
    %s969 = scalar_lea.sflag [#allocation8], 1
    %970 = vsyncpa %s969, 1

// kernel: tpu_custom_call.1
$region0: #{tpu_custom_call.1}
  #allocation0 [shape = 'u32[]', space=smem, size = 0x4, offset = 0x4, fixed_abs, tag = 'smem constant byte address 0x4 - core index']
  #allocation1 [shape = 'u32[144,128]{1,0:T(1,128)}', space=vmem, size = 0x12000, scoped, tag = 'internal scratch']
  #allocation2 [shape = 'f32[8,8]{1,0:T(8,128)}', space=vmem, size = 0x1000, scoped, tag = 'scratch operand']
  #allocation3 [shape = 'f32[8,1]{1,0:T(8,128)}', space=vmem, size = 0x1000, scoped, tag = 'scratch operand']
  #allocation4 [shape = 'f32[8,1]{1,0:T(8,128)}', space=vmem, size = 0x1000, scoped, tag = 'scratch operand']
  #allocation5 [shape = 'f32[8,8]{1,0:T(8,128)}', space=vmem, size = 0x1000, scoped, tag = 'scratch operand']
  #allocation6 [shape = 'f32[8,32]{1,0:T(8,128)}', space=vmem, size = 0x1000, scoped, tag = 'scratch operand']
  %s0 = inlined_call_operand.vmem [shape: f32[2,8,32], index: 0, kind: input, shape index: {}]
  %s1 = inlined_call_operand.vmem [shape: f32[2,8,32], index: 1, kind: input, shape index: {}]
  %s2 = inlined_call_operand.vmem [shape: f32[4,32,8], index: 2, kind: input, shape index: {}]
  %s3 = inlined_call_operand.vmem [shape: f32[4,1,8], index: 3, kind: input, shape index: {}]
  %s4 = inlined_call_operand.vmem [shape: f32[4,32,16], index: 4, kind: input, shape index: {}]
  %s5 = inlined_call_operand.vmem [shape: f32[4,1,16], index: 5, kind: input, shape index: {}]
  %s6 = inlined_call_operand.vmem [shape: f32[4,8,32], index: 6, kind: input, shape index: {}]
  %s7 = inlined_call_operand.vmem [shape: f32[1,32], index: 7, kind: input, shape index: {}]
  %s8 = inlined_call_operand.hbm [shape: f32[2,8,32], index: 8, kind: output, shape index: {}]
  %s9 = sld [smem:[#allocation0]]
  $region81: #{tpu_custom_call.1} parent=0
    _
  %s11 = ssub.s32 1, %s9
  %s12 = scalar_select 0, %s11, %s9
  $region1: #{tpu_custom_call.1} parent=0
    #allocation7 [shape = 'u8[8192]{0}', space=vmem, size = 0x2000, scoped, tag = 'output window, operand 0']
    #allocation8 [shape = 's32[2]{0}', space=sflag, size = 0x8, scoped, tag = 'scoped memory for tpu_custom_call.1']
    %13 = vsyncpa [#allocation8], 0
    %s14 = scalar_lea.sflag [#allocation8], 1
    %15 = vsyncpa %s14, 0
    loop: start=0, step=1, limit=10
    $region2: #{tpu_custom_call.1} parent=1 // loop_pre_header
      _
    $region3: #{tpu_custom_call.1} parent=1 // loop_header
      %s17 = sphi 0, %s21
      %p18 = scmp.ge.s32.totalorder %s17, 10
      %s24 = sphi 0, %s50
      %s25 = sphi 0, %s46
      %s26 = sphi 0, %s42
      %s27 = sphi 0, %s38
      %s28 = sphi 0, %s24
      %s29 = sphi 0, %s25
      %s30 = sphi 0, %s26
      %s31 = sphi 0, %s27
      %s32 = sphi 0, %s28
      %s33 = sphi 0, %s29
      %s34 = sphi 0, %s30
      %s35 = sphi 0, %s31
      %s55 = sphi 0, %s57
      %s58 = sphi 0, %s55
      %s59 = sphi 0, %s58
      %s75 = sphi 0, %s59
      %s83 = sphi 0, %s85
      %s86 = sphi 0, %s83
      %s87 = sphi 0, %s86
      %s103 = sphi 0, %s87
      %s109 = sphi 0, %s111
      %s112 = sphi 0, %s109
      %s113 = sphi 0, %s112
      %s129 = sphi 0, %s113
      %s135 = sphi 0, %s137
      %s138 = sphi 0, %s135
      %s139 = sphi 0, %s138
      %s155 = sphi 0, %s139
      %s161 = sphi 0, %s163
      %s164 = sphi 0, %s161
      %s165 = sphi 0, %s164
      %s181 = sphi 0, %s165
      %s187 = sphi 0, %s189
      %s190 = sphi 0, %s187
      %s191 = sphi 0, %s190
      %s207 = sphi 0, %s191
      %s213 = sphi 0, %s215
      %s216 = sphi 0, %s213
      %s217 = sphi 0, %s216
      %s233 = sphi 0, %s217
      %s237 = sphi 0, %s237
      %s239 = sphi 0, %s237
      %s240 = sphi 0, %s239
      %s254 = sphi 0, %s240
      %s262 = sphi 0, %s264
      %s265 = sphi 0, %s262
      %s266 = sphi 0, %s265
      %s282 = sphi 0, %s266
    $region4: #{tpu_custom_call.1} parent=1 // loop_header_branch
      %20 = sbr.rel (%p18) target = $region8
    $region5: #{tpu_custom_call.1} parent=1 // loop_body
      %s22 = ssub.s32 %s17, 1
      %s23 = ssub.s32 %s17, 2
      %s36 = sadd.s32 1, %s27
      %p37 = scmp.ge.s32.totalorder %s36, 1
      %s38 = scalar_select %p37, 0, %s36
      %s39 = sadd.s32 1, %s26
      %s40 = scalar_select %p37, %s39, %s26
      %p41 = scmp.ge.s32.totalorder %s40, 4
      %s42 = scalar_select %p41, 0, %s40
      %s43 = sadd.s32 1, %s25
      %s44 = scalar_select %p41, %s43, %s25
      %p45 = scmp.ge.s32.totalorder %s44, 1
      %s46 = scalar_select %p45, 0, %s44
      %s47 = sadd.s32 1, %s24
      %s48 = scalar_select %p45, %s47, %s24
      %p49 = scmp.ge.s32.totalorder %s48, 2
      %s50 = scalar_select %p49, 0, %s48
      %s51 = ssub.s32 %s24, %s50
      %s52 = ssub.s32 %s25, %s46
      %s53 = sor.u32 %s51, %s52
      %p54 = scmp.eq.s32.totalorder %s53, 0
      %s56 = sadd.s32 %s55, 1
      %s57 = scalar_select %p54, %s55, %s56
      %p60 = pneg %p54
      %p61 = scmp.eq.s32.totalorder %s17, 7
      %p62 = por %p60, %p61
      %p63 = scmp.ne.s32.totalorder %s55, %s58
      %p64 = scmp.eq.s32.totalorder %s17, 0
      %p65 = por %p63, %p64
      %p66 = scmp.ne.s32.totalorder %s55, %s58
      %p67 = scmp.eq.s32.totalorder %s22, 7
      %p68 = por %p66, %p67
      %p69 = scmp.ne.s32.totalorder %s58, %s59
      %p70 = scmp.eq.s32.totalorder %s22, 0
      %p71 = por %p69, %p70
      %p72 = scmp.ne.s32.totalorder %s58, %s59
      %p73 = scmp.eq.s32.totalorder %s23, 7
      %p74 = por %p72, %p73
      %p76 = scmp.ne.s32.totalorder %s59, %s75
      %p77 = scmp.eq.s32.totalorder %s23, 0
      %p78 = por %p76, %p77
      %s79 = ssub.s32 %s24, %s50
      %s80 = ssub.s32 %s27, %s38
      %s81 = sor.u32 %s79, %s80
      %p82 = scmp.eq.s32.totalorder %s81, 0
      %s84 = sadd.s32 %s83, 1
      %s85 = scalar_select %p82, %s83, %s84
      %p88 = pneg %p82
      %p89 = scmp.eq.s32.totalorder %s17, 7
      %p90 = por %p88, %p89
      %p91 = scmp.ne.s32.totalorder %s83, %s86
      %p92 = scmp.eq.s32.totalorder %s17, 0
      %p93 = por %p91, %p92
      %p94 = scmp.ne.s32.totalorder %s83, %s86
      %p95 = scmp.eq.s32.totalorder %s22, 7
      %p96 = por %p94, %p95
      %p97 = scmp.ne.s32.totalorder %s86, %s87
      %p98 = scmp.eq.s32.totalorder %s22, 0
      %p99 = por %p97, %p98
      %p100 = scmp.ne.s32.totalorder %s86, %s87
      %p101 = scmp.eq.s32.totalorder %s23, 7
      %p102 = por %p100, %p101
      %p104 = scmp.ne.s32.totalorder %s87, %s103
      %p105 = scmp.eq.s32.totalorder %s23, 0
      %p106 = por %p104, %p105
      %s107 = ssub.s32 %s26, %s42
      %p108 = scmp.eq.s32.totalorder %s107, 0
      %s110 = sadd.s32 %s109, 1
      %s111 = scalar_select %p108, %s109, %s110
      %p114 = pneg %p108
      %p115 = scmp.eq.s32.totalorder %s17, 7
      %p116 = por %p114, %p115
      %p117 = scmp.ne.s32.totalorder %s109, %s112
      %p118 = scmp.eq.s32.totalorder %s17, 0
      %p119 = por %p117, %p118
      %p120 = scmp.ne.s32.totalorder %s109, %s112
      %p121 = scmp.eq.s32.totalorder %s22, 7
      %p122 = por %p120, %p121
      %p123 = scmp.ne.s32.totalorder %s112, %s113
      %p124 = scmp.eq.s32.totalorder %s22, 0
      %p125 = por %p123, %p124
      %p126 = scmp.ne.s32.totalorder %s112, %s113
      %p127 = scmp.eq.s32.totalorder %s23, 7
      %p128 = por %p126, %p127
      %p130 = scmp.ne.s32.totalorder %s113, %s129
      %p131 = scmp.eq.s32.totalorder %s23, 0
      %p132 = por %p130, %p131
      %s133 = ssub.s32 %s26, %s42
      %p134 = scmp.eq.s32.totalorder %s133, 0
      %s136 = sadd.s32 %s135, 1
      %s137 = scalar_select %p134, %s135, %s136
      %p140 = pneg %p134
      %p141 = scmp.eq.s32.totalorder %s17, 7
      %p142 = por %p140, %p141
      %p143 = scmp.ne.s32.totalorder %s135, %s138
      %p144 = scmp.eq.s32.totalorder %s17, 0
      %p145 = por %p143, %p144
      %p146 = scmp.ne.s32.totalorder %s135, %s138
      %p147 = scmp.eq.s32.totalorder %s22, 7
      %p148 = por %p146, %p147
      %p149 = scmp.ne.s32.totalorder %s138, %s139
      %p150 = scmp.eq.s32.totalorder %s22, 0
      %p151 = por %p149, %p150
      %p152 = scmp.ne.s32.totalorder %s138, %s139
      %p153 = scmp.eq.s32.totalorder %s23, 7
      %p154 = por %p152, %p153
      %p156 = scmp.ne.s32.totalorder %s139, %s155
      %p157 = scmp.eq.s32.totalorder %s23, 0
      %p158 = por %p156, %p157
      %s159 = ssub.s32 %s26, %s42
      %p160 = scmp.eq.s32.totalorder %s159, 0
      %s162 = sadd.s32 %s161, 1
      %s163 = scalar_select %p160, %s161, %s162
      %p166 = pneg %p160
      %p167 = scmp.eq.s32.totalorder %s17, 7
      %p168 = por %p166, %p167
      %p169 = scmp.ne.s32.totalorder %s161, %s164
      %p170 = scmp.eq.s32.totalorder %s17, 0
      %p171 = por %p169, %p170
      %p172 = scmp.ne.s32.totalorder %s161, %s164
      %p173 = scmp.eq.s32.totalorder %s22, 7
      %p174 = por %p172, %p173
      %p175 = scmp.ne.s32.totalorder %s164, %s165
      %p176 = scmp.eq.s32.totalorder %s22, 0
      %p177 = por %p175, %p176
      %p178 = scmp.ne.s32.totalorder %s164, %s165
      %p179 = scmp.eq.s32.totalorder %s23, 7
      %p180 = por %p178, %p179
      %p182 = scmp.ne.s32.totalorder %s165, %s181
      %p183 = scmp.eq.s32.totalorder %s23, 0
      %p184 = por %p182, %p183
      %s185 = ssub.s32 %s26, %s42
      %p186 = scmp.eq.s32.totalorder %s185, 0
      %s188 = sadd.s32 %s187, 1
      %s189 = scalar_select %p186, %s187, %s188
      %p192 = pneg %p186
      %p193 = scmp.eq.s32.totalorder %s17, 7
      %p194 = por %p192, %p193
      %p195 = scmp.ne.s32.totalorder %s187, %s190
      %p196 = scmp.eq.s32.totalorder %s17, 0
      %p197 = por %p195, %p196
      %p198 = scmp.ne.s32.totalorder %s187, %s190
      %p199 = scmp.eq.s32.totalorder %s22, 7
      %p200 = por %p198, %p199
      %p201 = scmp.ne.s32.totalorder %s190, %s191
      %p202 = scmp.eq.s32.totalorder %s22, 0
      %p203 = por %p201, %p202
      %p204 = scmp.ne.s32.totalorder %s190, %s191
      %p205 = scmp.eq.s32.totalorder %s23, 7
      %p206 = por %p204, %p205
      %p208 = scmp.ne.s32.totalorder %s191, %s207
      %p209 = scmp.eq.s32.totalorder %s23, 0
      %p210 = por %p208, %p209
      %s211 = ssub.s32 %s26, %s42
      %p212 = scmp.eq.s32.totalorder %s211, 0
      %s214 = sadd.s32 %s213, 1
      %s215 = scalar_select %p212, %s213, %s214
      %p218 = pneg %p212
      %p219 = scmp.eq.s32.totalorder %s17, 7
      %p220 = por %p218, %p219
      %p221 = scmp.ne.s32.totalorder %s213, %s216
      %p222 = scmp.eq.s32.totalorder %s17, 0
      %p223 = por %p221, %p222
      %p224 = scmp.ne.s32.totalorder %s213, %s216
      %p225 = scmp.eq.s32.totalorder %s22, 7
      %p226 = por %p224, %p225
      %p227 = scmp.ne.s32.totalorder %s216, %s217
      %p228 = scmp.eq.s32.totalorder %s22, 0
      %p229 = por %p227, %p228
      %p230 = scmp.ne.s32.totalorder %s216, %s217
      %p231 = scmp.eq.s32.totalorder %s23, 7
      %p232 = por %p230, %p231
      %p234 = scmp.ne.s32.totalorder %s217, %s233
      %p235 = scmp.eq.s32.totalorder %s23, 0
      %p236 = por %p234, %p235
      %s238 = sadd.s32 %s237, 1
      %p241 = scmp.eq.s32.totalorder %s17, 7
      %p242 = scmp.ne.s32.totalorder %s237, %s239
      %p243 = scmp.eq.s32.totalorder %s17, 0
      %p244 = por %p242, %p243
      %p245 = scmp.ne.s32.totalorder %s237, %s239
      %p246 = scmp.eq.s32.totalorder %s22, 7
      %p247 = por %p245, %p246
      %p248 = scmp.ne.s32.totalorder %s239, %s240
      %p249 = scmp.eq.s32.totalorder %s22, 0
      %p250 = por %p248, %p249
      %p251 = scmp.ne.s32.totalorder %s239, %s240
      %p252 = scmp.eq.s32.totalorder %s23, 7
      %p253 = por %p251, %p252
      %p255 = scmp.ne.s32.totalorder %s240, %s254
      %p256 = scmp.eq.s32.totalorder %s23, 0
      %p257 = por %p255, %p256
      %s258 = ssub.s32 %s24, %s50
      %s259 = ssub.s32 %s25, %s46
      %s260 = sor.u32 %s258, %s259
      %p261 = scmp.eq.s32.totalorder %s260, 0
      %s263 = sadd.s32 %s262, 1
      %s264 = scalar_select %p261, %s262, %s263
      %p267 = pneg %p261
      %p268 = scmp.eq.s32.totalorder %s17, 7
      %p269 = por %p267, %p268
      %p270 = scmp.ne.s32.totalorder %s262, %s265
      %p271 = scmp.eq.s32.totalorder %s17, 0
      %p272 = por %p270, %p271
      %p273 = scmp.ne.s32.totalorder %s262, %s265
      %p274 = scmp.eq.s32.totalorder %s22, 7
      %p275 = por %p273, %p274
      %p276 = scmp.ne.s32.totalorder %s265, %s266
      %p277 = scmp.eq.s32.totalorder %s22, 0
      %p278 = por %p276, %p277
      %p279 = scmp.ne.s32.totalorder %s265, %s266
      %p280 = scmp.eq.s32.totalorder %s23, 7
      %p281 = por %p279, %p280
      %p283 = scmp.ne.s32.totalorder %s266, %s282
      %p284 = scmp.eq.s32.totalorder %s23, 0
      %p285 = por %p283, %p284
      %p286 = scmp.le.s32.totalorder 1, %s17
      %p287 = scmp.lt.s32.totalorder %s17, 9
      %p288 = pnand %p286, %p287
      %p289 = pneg %p288
      // Predicated region
      $region9: #{tpu_custom_call.1} parent=5 // pred_check
        _
      $region10: #{tpu_custom_call.1} parent=5 // pred_check_branch
        %291 = sbr.rel (%p288) target = $region12
      $region11: #{tpu_custom_call.1} parent=5 // pred_region
        %s292 = ssub.s32 %s17, 1
        // Predicated region
        $region13: #{tpu_custom_call.1} parent=11 // pred_check
          %p293 = pneg %p250
        $region14: #{tpu_custom_call.1} parent=11 // pred_check_branch
          %295 = sbr.rel (%p293) target = $region16
        $region15: #{tpu_custom_call.1} parent=11 // pred_region
          _
        $region16: #{tpu_custom_call.1} parent=11 // pred_fallthru
          _
      $region12: #{tpu_custom_call.1} parent=5 // pred_fallthru
        _
      %p296 = scmp.lt.s32.totalorder %s17, 8
      // Predicated region
      $region17: #{tpu_custom_call.1} parent=5 // pred_check
        %p297 = pneg %p296
      $region18: #{tpu_custom_call.1} parent=5 // pred_check_branch
        %299 = sbr.rel (%p297) target = $region20
      $region19: #{tpu_custom_call.1} parent=5 // pred_region
        // Predicated region
        $region21: #{tpu_custom_call.1} parent=19 // pred_check
          %p300 = pneg %p65
        $region22: #{tpu_custom_call.1} parent=19 // pred_check_branch
          %302 = sbr.rel (%p300) target = $region24
        $region23: #{tpu_custom_call.1} parent=19 // pred_region
          %p303 = scmp.lt.s32.totalorder %s24, 1
          %s304 = scalar_select %p303, %s24, 1
          %p305 = scmp.lt.s32.totalorder %s25, 0
          %s306 = scalar_select %p305, %s25, 0
          %s307 = sadd.s32 %s306, %s304
          %s308 = smul.addr %s307, 8
          %s309 = scalar_lea.vmem %s0, %s308
        $region24: #{tpu_custom_call.1} parent=19 // pred_fallthru
          _
        // Predicated region
        $region25: #{tpu_custom_call.1} parent=19 // pred_check
          %p310 = pneg %p93
        $region26: #{tpu_custom_call.1} parent=19 // pred_check_branch
          %312 = sbr.rel (%p310) target = $region28
        $region27: #{tpu_custom_call.1} parent=19 // pred_region
          %p313 = scmp.lt.s32.totalorder %s24, 1
          %s314 = scalar_select %p313, %s24, 1
          %p315 = scmp.lt.s32.totalorder %s27, 0
          %s316 = scalar_select %p315, %s27, 0
          %s317 = sadd.s32 %s316, %s314
          %s318 = smul.addr %s317, 8
          %s319 = scalar_lea.vmem %s1, %s318
        $region28: #{tpu_custom_call.1} parent=19 // pred_fallthru
          _
        // Predicated region
        $region29: #{tpu_custom_call.1} parent=19 // pred_check
          %p320 = pneg %p119
        $region30: #{tpu_custom_call.1} parent=19 // pred_check_branch
          %322 = sbr.rel (%p320) target = $region32
        $region31: #{tpu_custom_call.1} parent=19 // pred_region
          %p323 = scmp.lt.s32.totalorder %s26, 3
          %s324 = scalar_select %p323, %s26, 3
          %s325 = smul.addr %s324, 4
          %s326 = smul.addr %s325, 8
          %s327 = scalar_lea.vmem %s2, %s326
        $region32: #{tpu_custom_call.1} parent=19 // pred_fallthru
          _
        // Predicated region
        $region33: #{tpu_custom_call.1} parent=19 // pred_check
          %p328 = pneg %p145
        $region34: #{tpu_custom_call.1} parent=19 // pred_check_branch
          %330 = sbr.rel (%p328) target = $region36
        $region35: #{tpu_custom_call.1} parent=19 // pred_region
          %p331 = scmp.lt.s32.totalorder %s26, 3
          %s332 = scalar_select %p331, %s26, 3
          %s333 = scalar_lea.vmem %s3, %s332
        $region36: #{tpu_custom_call.1} parent=19 // pred_fallthru
          _
        // Predicated region
        $region37: #{tpu_custom_call.1} parent=19 // pred_check
          %p334 = pneg %p171
        $region38: #{tpu_custom_call.1} parent=19 // pred_check_branch
          %336 = sbr.rel (%p334) target = $region40
        $region39: #{tpu_custom_call.1} parent=19 // pred_region
          %p337 = scmp.lt.s32.totalorder %s26, 3
          %s338 = scalar_select %p337, %s26, 3
          %s339 = smul.addr %s338, 4
          %s340 = smul.addr %s339, 8
          %s341 = scalar_lea.vmem %s4, %s340
        $region40: #{tpu_custom_call.1} parent=19 // pred_fallthru
          _
        // Predicated region
        $region41: #{tpu_custom_call.1} parent=19 // pred_check
          %p342 = pneg %p197
        $region42: #{tpu_custom_call.1} parent=19 // pred_check_branch
          %344 = sbr.rel (%p342) target = $region44
        $region43: #{tpu_custom_call.1} parent=19 // pred_region
          %p345 = scmp.lt.s32.totalorder %s26, 3
          %s346 = scalar_select %p345, %s26, 3
          %s347 = scalar_lea.vmem %s5, %s346
        $region44: #{tpu_custom_call.1} parent=19 // pred_fallthru
          _
        // Predicated region
        $region45: #{tpu_custom_call.1} parent=19 // pred_check
          %p348 = pneg %p223
        $region46: #{tpu_custom_call.1} parent=19 // pred_check_branch
          %350 = sbr.rel (%p348) target = $region48
        $region47: #{tpu_custom_call.1} parent=19 // pred_region
          %p351 = scmp.lt.s32.totalorder %s26, 3
          %s352 = scalar_select %p351, %s26, 3
          %s353 = smul.addr %s352, 8
          %s354 = scalar_lea.vmem %s6, %s353
        $region48: #{tpu_custom_call.1} parent=19 // pred_fallthru
          _
      $region20: #{tpu_custom_call.1} parent=5 // pred_fallthru
        _
      %p355 = scmp.le.s32.totalorder 1, %s17
      %p356 = scmp.lt.s32.totalorder %s17, 9
      %p357 = pnand %p355, %p356
      %p358 = pneg %p357
      // Predicated region
      $region49: #{tpu_custom_call.1} parent=5 // pred_check
        _
      $region50: #{tpu_custom_call.1} parent=5 // pred_check_branch
        %360 = sbr.rel (%p357) target = $region52
      $region51: #{tpu_custom_call.1} parent=5 // pred_region
        %s361 = ssub.s32 %s17, 1
        %p362 = scmp.lt.s32.totalorder %s28, 1
        %s363 = scalar_select %p362, %s28, 1
        %p364 = scmp.lt.s32.totalorder %s29, 0
        %s365 = scalar_select %p364, %s29, 0
        %s366 = sadd.s32 %s365, %s363
        %s367 = smul.addr %s366, 8
        %s368 = scalar_lea.vmem %s0, %s367
        %p369 = pneg %p71
        %p370 = pneg %p68
        %p371 = scmp.lt.s32.totalorder %s28, 1
        %s372 = scalar_select %p371, %s28, 1
        %p373 = scmp.lt.s32.totalorder %s31, 0
        %s374 = scalar_select %p373, %s31, 0
        %s375 = sadd.s32 %s374, %s372
        %s376 = smul.addr %s375, 8
        %s377 = scalar_lea.vmem %s1, %s376
        %p378 = pneg %p99
        %p379 = pneg %p96
        %p380 = scmp.lt.s32.totalorder %s30, 3
        %s381 = scalar_select %p380, %s30, 3
        %s382 = smul.addr %s381, 4
        %s383 = smul.addr %s382, 8
        %s384 = scalar_lea.vmem %s2, %s383
        %p385 = pneg %p125
        %p386 = pneg %p122
        %p387 = scmp.lt.s32.totalorder %s30, 3
        %s388 = scalar_select %p387, %s30, 3
        %s389 = scalar_lea.vmem %s3, %s388
        %p390 = pneg %p151
        %p391 = pneg %p148
        %p392 = scmp.lt.s32.totalorder %s30, 3
        %s393 = scalar_select %p392, %s30, 3
        %s394 = smul.addr %s393, 4
        %s395 = smul.addr %s394, 8
        %s396 = scalar_lea.vmem %s4, %s395
        %p397 = pneg %p177
        %p398 = pneg %p174
        %p399 = scmp.lt.s32.totalorder %s30, 3
        %s400 = scalar_select %p399, %s30, 3
        %s401 = scalar_lea.vmem %s5, %s400
        %p402 = pneg %p203
        %p403 = pneg %p200
        %p404 = scmp.lt.s32.totalorder %s30, 3
        %s405 = scalar_select %p404, %s30, 3
        %s406 = smul.addr %s405, 8
        %s407 = scalar_lea.vmem %s6, %s406
        %p408 = pneg %p229
        %p409 = pneg %p226
        %p410 = pneg %p250
        %p411 = pneg %p247
        %p412 = pneg %p278
        %p413 = pneg %p275
        %s414 = sand.u32 %s265, 1
        %s415 = scalar_lea.sflag [#allocation8], %s414
        %s416 = sand.u32 %s265, 1
        %s417 = smul.addr %s416, 8
        %s418 = scalar_lea.vmem [#allocation7], %s417
        %p419 = scmp.lt.s32.totalorder %s28, 1
        %s420 = scalar_select %p419, %s28, 1
        %p421 = scmp.lt.s32.totalorder %s29, 0
        %s422 = scalar_select %p421, %s29, 0
        %s423 = sadd.s32 %s422, %s420
        %s424 = smul.addr %s423, 8
        %s425 = scalar_lea.vmem %s0, %s424
        %p426 = scmp.lt.s32.totalorder %s28, 1
        %s427 = scalar_select %p426, %s28, 1
        %p428 = scmp.lt.s32.totalorder %s31, 0
        %s429 = scalar_select %p428, %s31, 0
        %s430 = sadd.s32 %s429, %s427
        %s431 = smul.addr %s430, 8
        %s432 = scalar_lea.vmem %s1, %s431
        %p433 = scmp.lt.s32.totalorder %s30, 3
        %s434 = scalar_select %p433, %s30, 3
        %s435 = smul.addr %s434, 4
        %s436 = smul.addr %s435, 8
        %s437 = scalar_lea.vmem %s2, %s436
        %p438 = scmp.lt.s32.totalorder %s30, 3
        %s439 = scalar_select %p438, %s30, 3
        %s440 = scalar_lea.vmem %s3, %s439
        %p441 = scmp.lt.s32.totalorder %s30, 3
        %s442 = scalar_select %p441, %s30, 3
        %s443 = smul.addr %s442, 4
        %s444 = smul.addr %s443, 8
        %s445 = scalar_lea.vmem %s4, %s444
        %p446 = scmp.lt.s32.totalorder %s30, 3
        %s447 = scalar_select %p446, %s30, 3
        %s448 = scalar_lea.vmem %s5, %s447
        %p449 = scmp.lt.s32.totalorder %s30, 3
        %s450 = scalar_select %p449, %s30, 3
        %s451 = smul.addr %s450, 8
        %s452 = scalar_lea.vmem %s6, %s451
        %p453 = scmp.eq.s32.totalorder %s30, 0
        %p454 = scmp.eq.s32.totalorder %s31, 0
        %p455 = pnand %p453, %p454
        %p456 = pneg %p455
        // Predicated region
        $region53: #{tpu_custom_call.1} parent=51 // pred_check
          _
        $region54: #{tpu_custom_call.1} parent=51 // pred_check_branch
          %458 = sbr.rel (%p455) target = $region56
        $region55: #{tpu_custom_call.1} parent=51 // pred_region
          %vm459 = vcmask 261120
          %460 = vst.msk [vmem:[#allocation6] sm:$0xff] %vm459, 0.0
        $region56: #{tpu_custom_call.1} parent=51 // pred_fallthru
          _
        // Predicated region
        $region57: #{tpu_custom_call.1} parent=51 // pred_check
          %p461 = pneg %p454
        $region58: #{tpu_custom_call.1} parent=51 // pred_check_branch
          %463 = sbr.rel (%p461) target = $region60
        $region59: #{tpu_custom_call.1} parent=51 // pred_region
          %v464 = vld [vmem:[%s425] sm:$0xff]
          %v465 = vld [vmem:[%s437] sm:$0xff]
          %v466 = vld [vmem:[%s437 + $0x8] sm:$0xff]
          %v467 = vld [vmem:[%s437 + $0x10] sm:$0xff]
          %v468 = vld [vmem:[%s437 + $0x18] sm:$0xff]
          %v469 = vld [vmem:[%s440] sm:$0x1]
          %v471 = vlaneseq
          %v472 = vshrl.u32 %v471, 7
          %v473 = vsub.s32 0, %v472
          %v474 = vrot.slane %v469, %v473
          %vm476 = vcmask 261120
          %v478 = vsel %vm476, %v464, 0
          %480 = vmatprep.subr.mxu0 0.0
          %481 = vmatpush1.msra.mxu0 0.0
          %482 = vmatprep.subr.mxu0 0.0
          %483 = vmatpush1.msra.mxu0 0.0
          %484 = vmatprep.subr.mxu0 0.0
          %485 = vmatpush1.msra.mxu0 0.0
          %486 = vmatprep.subr.mxu0 0.0
          %487 = vmatpush1.msra.mxu0 0.0
          %488 = vmatprep.subr.mxu0 0.0
          %489 = vmatpush1.msra.mxu0 0.0
          %490 = vmatprep.subr.mxu0 0.0
          %491 = vmatpush1.msra.mxu0 0.0
          %492 = vmatprep.subr.mxu0 0.0
          %493 = vmatpush1.msra.mxu0 0.0
          %494 = vmatprep.subr.mxu0 0.0
          %495 = vmatpush1.msra.mxu0 0.0
          %496 = vmatprep.subr.mxu0 0.0
          %497 = vmatpush1.msra.mxu0 0.0
          %498 = vmatprep.subr.mxu0 0.0
          %499 = vmatpush1.msra.mxu0 0.0
          %500 = vmatprep.subr.mxu0 0.0
          %501 = vmatpush1.msra.mxu0 0.0
          %502 = vmatprep.subr.mxu0 0.0
          %503 = vmatpush1.msra.mxu0 0.0
          %504 = vmatprep.subr.mxu0 0.0
          %505 = vmatpush1.msra.mxu0 %v468
          %506 = vmatprep.subr.mxu0 0.0
          %507 = vmatpush1.msra.mxu0 %v467
          %508 = vmatprep.subr.mxu0 0.0
          %509 = vmatpush1.msra.mxu0 %v466
          %510 = vmatprep.subr.mxu0 0.0
          %511 = vmatpush1.msra.mxu0 %v465
          %512 = vmatprep.subr.mxu0 0.0
          %513 = vmatpush2.msra.mxu0 0.0
          %514 = vmatprep.subr.mxu0 0.0
          %515 = vmatpush2.msra.mxu0 0.0
          %516 = vmatprep.subr.mxu0 0.0
          %517 = vmatpush2.msra.mxu0 0.0
          %518 = vmatprep.subr.mxu0 0.0
          %519 = vmatpush2.msra.mxu0 0.0
          %520 = vmatprep.subr.mxu0 0.0
          %521 = vmatpush2.msra.mxu0 0.0
          %522 = vmatprep.subr.mxu0 0.0
          %523 = vmatpush2.msra.mxu0 0.0
          %524 = vmatprep.subr.mxu0 0.0
          %525 = vmatpush2.msra.mxu0 0.0
          %526 = vmatprep.subr.mxu0 0.0
          %527 = vmatpush2.msra.mxu0 0.0
          %528 = vmatprep.subr.mxu0 0.0
          %529 = vmatpush2.msra.mxu0 0.0
          %530 = vmatprep.subr.mxu0 0.0
          %531 = vmatpush2.msra.mxu0 0.0
          %532 = vmatprep.subr.mxu0 0.0
          %533 = vmatpush2.msra.mxu0 0.0
          %534 = vmatprep.subr.mxu0 0.0
          %535 = vmatpush2.msra.mxu0 0.0
          %536 = vmatprep.subr.mxu0 0.0
          %537 = vmatpush2.msra.mxu0 0.0
          %538 = vmatprep.subr.mxu0 0.0
          %539 = vmatpush2.msra.mxu0 0.0
          %540 = vmatprep.subr.mxu0 0.0
          %541 = vmatpush2.msra.mxu0 0.0
          %542 = vmatprep.subr.mxu0 0.0
          %543 = vmatpush2.msra.mxu0 0.0
          %544 = vmatprep.mubr.f32.mxu0 0.0
          %545 = vmatmul.mubr.f32.gmra.mxu0 %v478
          %v546 = vpop.f32.mrf.mxu0
          %v547 = vadd.f32 %v474, %v546
          %v548 = vpop.f32.mrf.mxu0
          %549 = vdwg.mxu0
          %v550 = vmul.f32 %v547, 0.35355338
          %vm551 = vcmask 64512
          %552 = vst.msk [vmem:[#allocation2] sm:$0xff] %vm551, %v550
          %vm553 = vcmask 7168
          %554 = vst.msk [vmem:[#allocation3] sm:$0xff] %vm553, -inf
          %555 = vst.msk [vmem:[#allocation4] sm:$0xff] %vm553, 0.0
          %556 = vst.msk [vmem:[#allocation5] sm:$0xff] %vm551, 0.0
        $region60: #{tpu_custom_call.1} parent=51 // pred_fallthru
          _
        %v557 = vld [vmem:[%s432] sm:$0xff]
        %v558 = vld [vmem:[%s445] sm:$0xff]
        %v559 = vld [vmem:[%s445 + $0x8] sm:$0xff]
        %v560 = vld [vmem:[%s445 + $0x10] sm:$0xff]
        %v561 = vld [vmem:[%s445 + $0x18] sm:$0xff]
        %v562 = vld [vmem:[%s448] sm:$0x1]
        %v564 = vlaneseq
        %v565 = vshrl.u32 %v564, 7
        %v566 = vsub.s32 0, %v565
        %v567 = vrot.slane %v562, %v566
        %vm569 = vcmask 261120
        %v571 = vsel %vm569, %v557, 0
        %573 = vmatprep.subr.mxu0 0.0
        %574 = vmatpush1.msra.mxu0 0.0
        %575 = vmatprep.subr.mxu0 0.0
        %576 = vmatpush1.msra.mxu0 0.0
        %577 = vmatprep.subr.mxu0 0.0
        %578 = vmatpush1.msra.mxu0 0.0
        %579 = vmatprep.subr.mxu0 0.0
        %580 = vmatpush1.msra.mxu0 0.0
        %581 = vmatprep.subr.mxu0 0.0
        %582 = vmatpush1.msra.mxu0 0.0
        %583 = vmatprep.subr.mxu0 0.0
        %584 = vmatpush1.msra.mxu0 0.0
        %585 = vmatprep.subr.mxu0 0.0
        %586 = vmatpush1.msra.mxu0 0.0
        %587 = vmatprep.subr.mxu0 0.0
        %588 = vmatpush1.msra.mxu0 0.0
        %589 = vmatprep.subr.mxu0 0.0
        %590 = vmatpush1.msra.mxu0 0.0
        %591 = vmatprep.subr.mxu0 0.0
        %592 = vmatpush1.msra.mxu0 0.0
        %593 = vmatprep.subr.mxu0 0.0
        %594 = vmatpush1.msra.mxu0 0.0
        %595 = vmatprep.subr.mxu0 0.0
        %596 = vmatpush1.msra.mxu0 0.0
        %597 = vmatprep.subr.mxu0 0.0
        %598 = vmatpush1.msra.mxu0 %v561
        %599 = vmatprep.subr.mxu0 0.0
        %600 = vmatpush1.msra.mxu0 %v560
        %601 = vmatprep.subr.mxu0 0.0
        %602 = vmatpush1.msra.mxu0 %v559
        %603 = vmatprep.subr.mxu0 0.0
        %604 = vmatpush1.msra.mxu0 %v558
        %605 = vmatprep.subr.mxu0 0.0
        %606 = vmatpush2.msra.mxu0 0.0
        %607 = vmatprep.subr.mxu0 0.0
        %608 = vmatpush2.msra.mxu0 0.0
        %609 = vmatprep.subr.mxu0 0.0
        %610 = vmatpush2.msra.mxu0 0.0
        %611 = vmatprep.subr.mxu0 0.0
        %612 = vmatpush2.msra.mxu0 0.0
        %613 = vmatprep.subr.mxu0 0.0
        %614 = vmatpush2.msra.mxu0 0.0
        %615 = vmatprep.subr.mxu0 0.0
        %616 = vmatpush2.msra.mxu0 0.0
        %617 = vmatprep.subr.mxu0 0.0
        %618 = vmatpush2.msra.mxu0 0.0
        %619 = vmatprep.subr.mxu0 0.0
        %620 = vmatpush2.msra.mxu0 0.0
        %621 = vmatprep.subr.mxu0 0.0
        %622 = vmatpush2.msra.mxu0 0.0
        %623 = vmatprep.subr.mxu0 0.0
        %624 = vmatpush2.msra.mxu0 0.0
        %625 = vmatprep.subr.mxu0 0.0
        %626 = vmatpush2.msra.mxu0 0.0
        %627 = vmatprep.subr.mxu0 0.0
        %628 = vmatpush2.msra.mxu0 0.0
        %629 = vmatprep.subr.mxu0 0.0
        %630 = vmatpush2.msra.mxu0 0.0
        %631 = vmatprep.subr.mxu0 0.0
        %632 = vmatpush2.msra.mxu0 0.0
        %633 = vmatprep.subr.mxu0 0.0
        %634 = vmatpush2.msra.mxu0 0.0
        %635 = vmatprep.subr.mxu0 0.0
        %636 = vmatpush2.msra.mxu0 0.0
        %637 = vmatprep.mubr.f32.mxu0 0.0
        %638 = vmatmul.mubr.f32.gmra.mxu0 %v571
        %v639 = vpop.f32.mrf.mxu0
        %v640 = vadd.f32 %v567, %v639
        %v641 = vpop.f32.mrf.mxu0
        %642 = vdwg.mxu0
        %v643 = vld [vmem:[#allocation2] sm:$0xff]
        %vm644 = vcmask 64512
        %v646 = vsel %vm644, %v643, 0
        %v649 = vsel %vm644, %v640, 0
        %651 = vmatprep.subr.mxu0 0.0
        %652 = vmatpush1.xpose.msra.mxu0 0.0
        %653 = vmatprep.subr.mxu0 0.0
        %654 = vmatpush1.xpose.msra.mxu0 0.0
        %655 = vmatprep.subr.mxu0 0.0
        %656 = vmatpush1.xpose.msra.mxu0 0.0
        %657 = vmatprep.subr.mxu0 0.0
        %658 = vmatpush1.xpose.msra.mxu0 0.0
        %659 = vmatprep.subr.mxu0 0.0
        %660 = vmatpush1.xpose.msra.mxu0 0.0
        %661 = vmatprep.subr.mxu0 0.0
        %662 = vmatpush1.xpose.msra.mxu0 0.0
        %663 = vmatprep.subr.mxu0 0.0
        %664 = vmatpush1.xpose.msra.mxu0 0.0
        %665 = vmatprep.subr.mxu0 0.0
        %666 = vmatpush1.xpose.msra.mxu0 0.0
        %667 = vmatprep.subr.mxu0 0.0
        %668 = vmatpush1.xpose.msra.mxu0 0.0
        %669 = vmatprep.subr.mxu0 0.0
        %670 = vmatpush1.xpose.msra.mxu0 0.0
        %671 = vmatprep.subr.mxu0 0.0
        %672 = vmatpush1.xpose.msra.mxu0 0.0
        %673 = vmatprep.subr.mxu0 0.0
        %674 = vmatpush1.xpose.msra.mxu0 0.0
        %675 = vmatprep.subr.mxu0 0.0
        %676 = vmatpush1.xpose.msra.mxu0 0.0
        %677 = vmatprep.subr.mxu0 0.0
        %678 = vmatpush1.xpose.msra.mxu0 0.0
        %679 = vmatprep.subr.mxu0 0.0
        %680 = vmatpush1.xpose.msra.mxu0 0.0
        %681 = vmatprep.subr.mxu0 0.0
        %682 = vmatpush1.xpose.msra.mxu0 %v649
        %683 = vmatprep.subr.mxu0 0.0
        %684 = vmatpush2.xpose.msra.mxu0 0.0
        %685 = vmatprep.subr.mxu0 0.0
        %686 = vmatpush2.xpose.msra.mxu0 0.0
        %687 = vmatprep.subr.mxu0 0.0
        %688 = vmatpush2.xpose.msra.mxu0 0.0
        %689 = vmatprep.subr.mxu0 0.0
        %690 = vmatpush2.xpose.msra.mxu0 0.0
        %691 = vmatprep.subr.mxu0 0.0
        %692 = vmatpush2.xpose.msra.mxu0 0.0
        %693 = vmatprep.subr.mxu0 0.0
        %694 = vmatpush2.xpose.msra.mxu0 0.0
        %695 = vmatprep.subr.mxu0 0.0
        %696 = vmatpush2.xpose.msra.mxu0 0.0
        %697 = vmatprep.subr.mxu0 0.0
        %698 = vmatpush2.xpose.msra.mxu0 0.0
        %699 = vmatprep.subr.mxu0 0.0
        %700 = vmatpush2.xpose.msra.mxu0 0.0
        %701 = vmatprep.subr.mxu0 0.0
        %702 = vmatpush2.xpose.msra.mxu0 0.0
        %703 = vmatprep.subr.mxu0 0.0
        %704 = vmatpush2.xpose.msra.mxu0 0.0
        %705 = vmatprep.subr.mxu0 0.0
        %706 = vmatpush2.xpose.msra.mxu0 0.0
        %707 = vmatprep.subr.mxu0 0.0
        %708 = vmatpush2.xpose.msra.mxu0 0.0
        %709 = vmatprep.subr.mxu0 0.0
        %710 = vmatpush2.xpose.msra.mxu0 0.0
        %711 = vmatprep.subr.mxu0 0.0
        %712 = vmatpush2.xpose.msra.mxu0 0.0
        %713 = vmatprep.subr.mxu0 0.0
        %714 = vmatpush2.xpose.msra.mxu0 0.0
        %715 = vmatprep.mubr.f32.mxu0 0.0
        %716 = vmatmul.mubr.f32.gmra.mxu0 %v646
        %v717 = vpop.f32.mrf.mxu0
        %v718 = vadd.f32 0.0, %v717
        %v719 = vpop.f32.mrf.mxu0
        %720 = vdwg.mxu0
        %v721 = vld [vmem:[#allocation3] sm:$0xff]
        %v722 = vsel %vm644, %v718, -inf
        %723 = vmax.xlane.f32.xlu0 %v722
        %v724 = vpop.xlane.xlu0 %723
        %v725 = vmax.f32 %v721, %v724
        %v726 = vsub.f32 %v721, %v725
        %v727 = vmul.f32 %v726, 1.442695
        %v728 = vpow.pop %v727
        %730 = vset.pattern.permute.xlu0 0
        %731 = vperm.xlu0 %730, %v725
        %v732 = vpop.permute.xlu0 %731
        %v734 = vsub.f32 %v718, %v732
        %v735 = vmul.f32 %v734, 1.442695
        %v736 = vpow.pop %v735
        %v737 = vld [vmem:[#allocation4] sm:$0xff]
        %v738 = vmul.f32 %v728, %v737
        %v739 = vsel %vm644, %v736, 0.0
        %740 = vadd.xlane.f32.xlu0 %v739
        %v741 = vpop.xlane.xlu0 %740
        %v742 = vadd.f32 %v738, %v741
        %vm743 = vcmask 7168
        %744 = vst.msk [vmem:[#allocation4] sm:$0xff] %vm743, %v742
        %v745 = vld [vmem:[#allocation5] sm:$0xff]
        %747 = vset.pattern.permute.xlu0 0
        %748 = vperm.xlu0 %747, %v728
        %v749 = vpop.permute.xlu0 %748
        %v751 = vmul.f32 %v749, %v745
        %752 = vrot.lane.b32.xlu0 %v640, 120
        %v753 = vpop.permute.xlu0 %752
        %v756 = vsel %vm644, %v736, 0
        %758 = vmatprep.subr.mxu0 0.0
        %759 = vmatpush1.msra.mxu0 0.0
        %760 = vmatprep.subr.mxu0 0.0
        %761 = vmatpush1.msra.mxu0 0.0
        %762 = vmatprep.subr.mxu0 0.0
        %763 = vmatpush1.msra.mxu0 0.0
        %764 = vmatprep.subr.mxu0 0.0
        %765 = vmatpush1.msra.mxu0 0.0
        %766 = vmatprep.subr.mxu0 0.0
        %767 = vmatpush1.msra.mxu0 0.0
        %768 = vmatprep.subr.mxu0 0.0
        %769 = vmatpush1.msra.mxu0 0.0
        %770 = vmatprep.subr.mxu0 0.0
        %771 = vmatpush1.msra.mxu0 0.0
        %772 = vmatprep.subr.mxu0 0.0
        %773 = vmatpush1.msra.mxu0 0.0
        %774 = vmatprep.subr.mxu0 0.0
        %775 = vmatpush1.msra.mxu0 0.0
        %776 = vmatprep.subr.mxu0 0.0
        %777 = vmatpush1.msra.mxu0 0.0
        %778 = vmatprep.subr.mxu0 0.0
        %779 = vmatpush1.msra.mxu0 0.0
        %780 = vmatprep.subr.mxu0 0.0
        %781 = vmatpush1.msra.mxu0 0.0
        %782 = vmatprep.subr.mxu0 0.0
        %783 = vmatpush1.msra.mxu0 0.0
        %784 = vmatprep.subr.mxu0 0.0
        %785 = vmatpush1.msra.mxu0 0.0
        %786 = vmatprep.subr.mxu0 0.0
        %787 = vmatpush1.msra.mxu0 0.0
        %788 = vmatprep.subr.mxu0 0.0
        %789 = vmatpush1.msra.mxu0 %v753
        %790 = vmatprep.subr.mxu0 0.0
        %791 = vmatpush2.msra.mxu0 0.0
        %792 = vmatprep.subr.mxu0 0.0
        %793 = vmatpush2.msra.mxu0 0.0
        %794 = vmatprep.subr.mxu0 0.0
        %795 = vmatpush2.msra.mxu0 0.0
        %796 = vmatprep.subr.mxu0 0.0
        %797 = vmatpush2.msra.mxu0 0.0
        %798 = vmatprep.subr.mxu0 0.0
        %799 = vmatpush2.msra.mxu0 0.0
        %800 = vmatprep.subr.mxu0 0.0
        %801 = vmatpush2.msra.mxu0 0.0
        %802 = vmatprep.subr.mxu0 0.0
        %803 = vmatpush2.msra.mxu0 0.0
        %804 = vmatprep.subr.mxu0 0.0
        %805 = vmatpush2.msra.mxu0 0.0
        %806 = vmatprep.subr.mxu0 0.0
        %807 = vmatpush2.msra.mxu0 0.0
        %808 = vmatprep.subr.mxu0 0.0
        %809 = vmatpush2.msra.mxu0 0.0
        %810 = vmatprep.subr.mxu0 0.0
        %811 = vmatpush2.msra.mxu0 0.0
        %812 = vmatprep.subr.mxu0 0.0
        %813 = vmatpush2.msra.mxu0 0.0
        %814 = vmatprep.subr.mxu0 0.0
        %815 = vmatpush2.msra.mxu0 0.0
        %816 = vmatprep.subr.mxu0 0.0
        %817 = vmatpush2.msra.mxu0 0.0
        %818 = vmatprep.subr.mxu0 0.0
        %819 = vmatpush2.msra.mxu0 0.0
        %820 = vmatprep.subr.mxu0 0.0
        %821 = vmatpush2.msra.mxu0 0.0
        %822 = vmatprep.mubr.f32.mxu0 0.0
        %823 = vmatmul.mubr.f32.gmra.mxu0 %v756
        %v824 = vpop.f32.mrf.mxu0
        %v825 = vadd.f32 0.0, %v824
        %v826 = vpop.f32.mrf.mxu0
        %827 = vdwg.mxu0
        %v828 = vadd.f32 %v751, %v825
        %829 = vst.msk [vmem:[#allocation5] sm:$0xff] %vm644, %v828
        %830 = vst.msk [vmem:[#allocation3] sm:$0xff] %vm743, %v725
        // Predicated region
        $region61: #{tpu_custom_call.1} parent=51 // pred_check
          %p831 = pneg %p454
        $region62: #{tpu_custom_call.1} parent=51 // pred_check_branch
          %833 = sbr.rel (%p831) target = $region64
        $region63: #{tpu_custom_call.1} parent=51 // pred_region
          %v834 = vld [vmem:[#allocation5] sm:$0xff]
          %v835 = vld [vmem:[#allocation4] sm:$0xff]
          %v836 = vrcp.pop %v835
          %838 = vset.pattern.permute.xlu0 0
          %839 = vperm.xlu0 %838, %v836
          %v840 = vpop.permute.xlu0 %839
          %v842 = vmul.f32 %v834, %v840
          %v843 = vld [vmem:[#allocation6] sm:$0xff]
          %v844 = vld [vmem:[%s452] sm:$0xff]
          %v846 = vsel %vm644, %v842, 0
          %848 = vmatprep.subr.mxu0 0.0
          %849 = vmatpush1.msra.mxu0 0.0
          %850 = vmatprep.subr.mxu0 0.0
          %851 = vmatpush1.msra.mxu0 0.0
          %852 = vmatprep.subr.mxu0 0.0
          %853 = vmatpush1.msra.mxu0 0.0
          %854 = vmatprep.subr.mxu0 0.0
          %855 = vmatpush1.msra.mxu0 0.0
          %856 = vmatprep.subr.mxu0 0.0
          %857 = vmatpush1.msra.mxu0 0.0
          %858 = vmatprep.subr.mxu0 0.0
          %859 = vmatpush1.msra.mxu0 0.0
          %860 = vmatprep.subr.mxu0 0.0
          %861 = vmatpush1.msra.mxu0 0.0
          %862 = vmatprep.subr.mxu0 0.0
          %863 = vmatpush1.msra.mxu0 0.0
          %864 = vmatprep.subr.mxu0 0.0
          %865 = vmatpush1.msra.mxu0 0.0
          %866 = vmatprep.subr.mxu0 0.0
          %867 = vmatpush1.msra.mxu0 0.0
          %868 = vmatprep.subr.mxu0 0.0
          %869 = vmatpush1.msra.mxu0 0.0
          %870 = vmatprep.subr.mxu0 0.0
          %871 = vmatpush1.msra.mxu0 0.0
          %872 = vmatprep.subr.mxu0 0.0
          %873 = vmatpush1.msra.mxu0 0.0
          %874 = vmatprep.subr.mxu0 0.0
          %875 = vmatpush1.msra.mxu0 0.0
          %876 = vmatprep.subr.mxu0 0.0
          %877 = vmatpush1.msra.mxu0 0.0
          %878 = vmatprep.subr.mxu0 0.0
          %879 = vmatpush1.msra.mxu0 %v844
          %880 = vmatprep.subr.mxu0 0.0
          %881 = vmatpush2.msra.mxu0 0.0
          %882 = vmatprep.subr.mxu0 0.0
          %883 = vmatpush2.msra.mxu0 0.0
          %884 = vmatprep.subr.mxu0 0.0
          %885 = vmatpush2.msra.mxu0 0.0
          %886 = vmatprep.subr.mxu0 0.0
          %887 = vmatpush2.msra.mxu0 0.0
          %888 = vmatprep.subr.mxu0 0.0
          %889 = vmatpush2.msra.mxu0 0.0
          %890 = vmatprep.subr.mxu0 0.0
          %891 = vmatpush2.msra.mxu0 0.0
          %892 = vmatprep.subr.mxu0 0.0
          %893 = vmatpush2.msra.mxu0 0.0
          %894 = vmatprep.subr.mxu0 0.0
          %895 = vmatpush2.msra.mxu0 0.0
          %896 = vmatprep.subr.mxu0 0.0
          %897 = vmatpush2.msra.mxu0 0.0
          %898 = vmatprep.subr.mxu0 0.0
          %899 = vmatpush2.msra.mxu0 0.0
          %900 = vmatprep.subr.mxu0 0.0
          %901 = vmatpush2.msra.mxu0 0.0
          %902 = vmatprep.subr.mxu0 0.0
          %903 = vmatpush2.msra.mxu0 0.0
          %904 = vmatprep.subr.mxu0 0.0
          %905 = vmatpush2.msra.mxu0 0.0
          %906 = vmatprep.subr.mxu0 0.0
          %907 = vmatpush2.msra.mxu0 0.0
          %908 = vmatprep.subr.mxu0 0.0
          %909 = vmatpush2.msra.mxu0 0.0
          %910 = vmatprep.subr.mxu0 0.0
          %911 = vmatpush2.msra.mxu0 0.0
          %912 = vmatprep.mubr.f32.mxu0 0.0
          %913 = vmatmul.mubr.f32.gmra.mxu0 %v846
          %v914 = vpop.f32.mrf.mxu0
          %v915 = vadd.f32 0.0, %v914
          %v916 = vpop.f32.mrf.mxu0
          %917 = vdwg.mxu0
          %v918 = vadd.f32 %v843, %v915
          %919 = vst.msk [vmem:[#allocation6] sm:$0xff] %vm569, %v918
        $region64: #{tpu_custom_call.1} parent=51 // pred_fallthru
          _
        %p920 = scmp.eq.s32.totalorder %s30, 3
        %p921 = pnand %p920, %p454
        %p922 = pneg %p921
        // Predicated region
        $region65: #{tpu_custom_call.1} parent=51 // pred_check
          _
        $region66: #{tpu_custom_call.1} parent=51 // pred_check_branch
          %924 = sbr.rel (%p921) target = $region68
        $region67: #{tpu_custom_call.1} parent=51 // pred_region
          %v925 = vld [vmem:[#allocation6] sm:$0xff]
          %v926 = vld [vmem:[%s7] sm:$0x1]
          %v928 = vlaneseq
          %v929 = vshrl.u32 %v928, 7
          %v930 = vsub.s32 0, %v929
          %v931 = vrot.slane %v926, %v930
          %v933 = vadd.f32 %v925, %v931
          %934 = vst.msk [vmem:[%s418] sm:$0xff] %vm569, %v933
        $region68: #{tpu_custom_call.1} parent=51 // pred_fallthru
          _
        %s935 = sand.u32 %s265, 1
        %s936 = scalar_lea.sflag [#allocation8], %s935
        %s937 = sand.u32 %s265, 1
        %s938 = smul.addr %s937, 8
        %s939 = scalar_lea.vmem [#allocation7], %s938
        // Predicated region
        $region69: #{tpu_custom_call.1} parent=51 // pred_check
          %p940 = pneg %p275
        $region70: #{tpu_custom_call.1} parent=51 // pred_check_branch
          %942 = sbr.rel (%p940) target = $region72
        $region71: #{tpu_custom_call.1} parent=51 // pred_region
          %s944 = ssub.s32 128, 128
          %945 = vsyncadd %s936, %s944
          %s946 = sadd.s32 %s29, %s28
          %s947 = smul.addr %s946, 128
          %s948 = scalar_lea.hbm %s8, %s947
          %s950 = sshll.u32 %s939, 4
          %s951 = int_to_ptr.vmem [resolvable:$true] %s950
          %953 = dma.vmem_to_hbm [thread:$0]  %s951, 128, %s948, %s936
        $region72: #{tpu_custom_call.1} parent=51 // pred_fallthru
          _
      $region52: #{tpu_custom_call.1} parent=5 // pred_fallthru
        _
      %p954 = scmp.le.s32.totalorder 2, %s17
      // Predicated region
      $region73: #{tpu_custom_call.1} parent=5 // pred_check
        %p955 = pneg %p954
      $region74: #{tpu_custom_call.1} parent=5 // pred_check_branch
        %957 = sbr.rel (%p955) target = $region76
      $region75: #{tpu_custom_call.1} parent=5 // pred_region
        %s958 = ssub.s32 %s17, 2
        // Predicated region
        $region77: #{tpu_custom_call.1} parent=75 // pred_check
          %p959 = pneg %p281
        $region78: #{tpu_custom_call.1} parent=75 // pred_check_branch
          %961 = sbr.rel (%p959) target = $region80
        $region79: #{tpu_custom_call.1} parent=75 // pred_region
          %s962 = sand.u32 %s266, 1
          %s963 = scalar_lea.sflag [#allocation8], %s962
          %s964 = sand.u32 %s266, 1
          %s965 = smul.addr %s964, 8
          %s966 = scalar_lea.vmem [#allocation7], %s965
          %967 = dma.done %s963, 128
        $region80: #{tpu_custom_call.1} parent=75 // pred_fallthru
          _
      $region76: #{tpu_custom_call.1} parent=5 // pred_fallthru
        _
    $region6: #{tpu_custom_call.1} parent=1 // loop_footer
      %s21 = sadd.s32 1, %s17
    $region7: #{tpu_custom_call.1} parent=1 // loop_footer_branch
      %16 = sbr.rel target = $region3
    $region8: #{tpu_custom_call.1} parent=1 // loop_exit
      _
    %968 = vsyncpa [#allocation8], 1
    %s969 = scalar_lea.sflag [#allocation8], 1
    %970 = vsyncpa %s969, 1

</llo_original>
